<compile_context>
chip_gen: v5e
topology: v5e:2x2
jax: 0.10.0
libtpu: 0.0.40
codegen_flags: <defaults>
</compile_context>

<pallas_src>
import math

import numpy as np
import jax
import jax.numpy as jnp
from jax.experimental import pallas as pl
from jax.experimental.pallas import tpu as pltpu


def _round_up(x, m):
    return ((x + m - 1) // m) * m


# ----------------------------------------------------------------------------
# Pallas Cauchy kernel (conjugate-pair fused, denominator shared across A*C)
# ----------------------------------------------------------------------------
def _make_cauchy_kernel(AC, N, TH, TF, use_newton=True):
    n_chunks = TH // 8

    def kernel(vr_ref, vi_ref, wr_ref, wi_ref, zr_ref, zi_ref, rr_ref, ri_ref):
        zr = zr_ref[...]                      # (1, TF)
        zi = zi_ref[...]

        @pl.loop(0, n_chunks)
        def _chunk(c):
            r0 = pl.multiple_of(c * 8, 8)     # 8-row sublane chunk within the TH block
            acc_r = [jnp.zeros((8, TF), jnp.float32) for _ in range(AC)]
            acc_i = [jnp.zeros((8, TF), jnp.float32) for _ in range(AC)]

            # Static unroll over the half-size (conjugate-fused) state dim.
            # TODO(synk): a lax.fori_loop here would require a dynamic lane-dim slice of
            # w/v; keep the static unroll for lowering robustness (N is typically <= 64).
            for n in range(N):
                wr = wr_ref[pl.ds(r0, 8), n:n + 1]        # (8, 1)
                wi = wi_ref[pl.ds(r0, 8), n:n + 1]
                dr = zr - wr                               # (8, TF) shared by both branches
                di1 = zi - wi                              # z - w
                di2 = zi + wi                              # z - conj(w)
                drdr = dr * dr
                d1 = drdr + di1 * di1
                d2 = drdr + di2 * di2
                # EUP approximate reciprocal (+ optional one Newton refinement to ~f32).
                inv1 = pl.reciprocal(d1, approx=True)
                inv2 = pl.reciprocal(d2, approx=True)
                if use_newton:
                    inv1 = inv1 * (2.0 - d1 * inv1)
                    inv2 = inv2 * (2.0 - d2 * inv2)
                c1 = dr * inv1
                c2 = dr * inv2
                e1 = di1 * inv1
                e2 = di2 * inv2
                a1 = c1 + c2      # coeff of vr in Re
                a2 = e1 - e2      # coeff of vi in Re
                b1 = c1 - c2      # coeff of vi in Im
                b2 = e1 + e2      # coeff of -vr in Im
                # Numerators: all denominator work above is shared across AC planes.
                # NOTE(v6e): the (8,1)->(8,TF) lane broadcasts of wr/wi/vr/vi land on the
                # XLU slots; today they hide under the VALU work.  If the VALU side is cut
                # further, re-check XLU slot_util before adding more broadcasts here.
                for ac in range(AC):
                    vr = vr_ref[ac, pl.ds(r0, 8), n:n + 1]    # (8, 1)
                    vi = vi_ref[ac, pl.ds(r0, 8), n:n + 1]
                    acc_r[ac] = acc_r[ac] + (vr * a1 + vi * a2)
                    acc_i[ac] = acc_i[ac] + (vi * b1 - vr * b2)

            # Single lane-dense store per (chunk, ac) plane.
            for ac in range(AC):
                rr_ref[ac, pl.ds(r0, 8), :] = acc_r[ac]
                ri_ref[ac, pl.ds(r0, 8), :] = acc_i[ac]

    return kernel


def _pick_tf(tf_cap, F_pad128, grid_h):
    """Largest TF (multiple of 128, <= cap) preferring >=2 total grid steps and an
    even total step count (megacore on v7x); shrinking TF is free for a VALU-bound
    loop, so the preference costs nothing."""
    cap = max(128, min(tf_cap, F_pad128))
    cands = list(range(cap, 127, -128))

    def score(t):
        f_pad = _round_up(F_pad128, t)
        gf = f_pad // t
        total = grid_h * gf
        return (total >= 2, total % 2 == 0, t)

    return max(cands, key=score)


def cauchy_pallas(v, z, w, use_newton=True):
    """Conjugate-symmetric Cauchy sum (== cauchy_naive on _conj-doubled v, w).

    v: (A, C, H, N) complex64, w: (H, N) complex64, z: (F,) complex64
    returns (A, C, H, F) complex64
    """
    A, Cd, H, N = v.shape
    AC = A * Cd
    F = z.shape[0]

    # --- adaptive tile sizes -------------------------------------------------
    # The binding resource on v5e/v6e/v7x is the 64-entry vreg file, not VMEM.
    # Live (8, TF) f32 planes in the inner n-iteration:
    #   2*AC accumulators + ~12 temps (zr, zi, dr, di1, di2, d1/inv1, d2/inv2,
    #   c1, c2, e1, e2, + broadcast/product temporaries).
    # Budget ~52 of 64 vregs -> TF <= 128 * 52 / (2*AC + 12), so the statically
    # unrolled loop never spills (verified target: zero spill vld/vst in the dump).
    H_pad8 = _round_up(H, 8)
    TH = min(128, H_pad8)
    H_pad = _round_up(H_pad8, TH)
    grid_h = H_pad // TH

    F_pad128 = _round_up(F, 128)
    planes = 2 * AC + 12
    tf_cap = max(128, (52 * 128 // planes) // 128 * 128)
    TF = _pick_tf(tf_cap, F_pad128, grid_h)
    F_pad = _round_up(F_pad128, TF)

    # --- operand planes (f32 real/imag) ---
    v2 = v.reshape(AC, H, N)
    vr = jnp.zeros((AC, H_pad, N), jnp.float32).at[:, :H, :].set(jnp.real(v2).astype(jnp.float32))
    vi = jnp.zeros((AC, H_pad, N), jnp.float32).at[:, :H, :].set(jnp.imag(v2).astype(jnp.float32))
    # padded h rows keep |z - w| > 0 (their v is 0 and the rows are sliced off anyway)
    wr = jnp.full((H_pad, N), -1.0, jnp.float32).at[:H, :].set(jnp.real(w).astype(jnp.float32))
    wi = jnp.zeros((H_pad, N), jnp.float32).at[:H, :].set(jnp.imag(w).astype(jnp.float32))
    zr = jnp.full((1, F_pad), 1.0, jnp.float32).at[0, :F].set(jnp.real(z).astype(jnp.float32))
    zi = jnp.zeros((1, F_pad), jnp.float32).at[0, :F].set(jnp.imag(z).astype(jnp.float32))

    # Grid: F (j) is the LAST / innermost axis and the v/w index maps do not depend
    # on j, so the (AC,TH,N) v and (TH,N) w blocks keep the same block index across
    # the whole F sweep and are not re-DMA'd.  Do not reorder.
    grid = (grid_h, F_pad // TF)
    v_spec = pl.BlockSpec((AC, TH, N), lambda i, j: (0, i, 0))
    w_spec = pl.BlockSpec((TH, N), lambda i, j: (i, 0))
    z_spec = pl.BlockSpec((1, TF), lambda i, j: (0, j))
    o_spec = pl.BlockSpec((AC, TH, TF), lambda i, j: (0, i, j))

    rr, ri = pl.pallas_call(
        _make_cauchy_kernel(AC, N, TH, TF, use_newton=use_newton),
        grid=grid,
        in_specs=[v_spec, v_spec, w_spec, w_spec, z_spec, z_spec],
        out_specs=[o_spec, o_spec],
        out_shape=[jax.ShapeDtypeStruct((AC, H_pad, F_pad), jnp.float32),
                   jax.ShapeDtypeStruct((AC, H_pad, F_pad), jnp.float32)],
        compiler_params=pltpu.CompilerParams(
            dimension_semantics=("parallel", "parallel")),
    )(vr, vi, wr, wi, zr, zi)

    r = jax.lax.complex(rr[:, :H, :F], ri[:, :H, :F])
    return r.reshape(A, Cd, H, F)


def _cauchy_ref(v, z, w):
    """Pure-jnp reference: sum over conj-doubled state dim."""
    vc = jnp.concatenate([v, jnp.conj(v)], axis=-1)          # (A, C, H, 2N)
    wc = jnp.concatenate([w, jnp.conj(w)], axis=-1)          # (H, 2N)
    den = z[None, None, None, None, :] - wc[None, None, :, :, None]   # (1,1,H,2N,F)
    return jnp.sum(vc[..., None] / den, axis=-2)             # (A, C, H, F)


# ----------------------------------------------------------------------------
# Plain-JAX glue reproducing SSKernelNPLR semantics
# ----------------------------------------------------------------------------
def _conj(x):
    return jnp.concatenate([x, jnp.conj(x)], axis=-1)


def _matrix_power(A, L):
    """A^L via binary exponentiation (matches power() in the reference)."""
    E = jnp.broadcast_to(jnp.eye(A.shape[-1], dtype=A.dtype), A.shape)
    P = A
    while L > 0:
        if L % 2 == 1:
            E = P @ E
        L //= 2
        if L > 0:
            P = P @ P
    return E


class SSKernelNPLRJax:
    def __init__(self, w, P, B, C, log_dt, L=None, real_type="exp", real_tolerance=1e-3):
        self.rank = P.shape[-3]
        self.H = log_dt.shape[-1]
        self.N = w.shape[-1]
        self.n_ssm = w.shape[0]
        assert self.H % self.n_ssm == 0
        self.broadcast = self.H // self.n_ssm
        self.real_type = real_type
        self.real_tolerance = real_tolerance

        C = jnp.broadcast_to(jnp.asarray(C, jnp.complex64), (C.shape[0], self.H, self.N))
        self.C = C                                              # (channels, H, N)
        self.B = jnp.asarray(B, jnp.complex64)[None]            # (1, S, N)
        self.P = jnp.asarray(P, jnp.complex64)                  # (R, S, N)
        self.log_dt = jnp.asarray(log_dt, jnp.float32)          # (H,)

        w_real = jnp.minimum(jnp.real(w), -real_tolerance)
        self.inv_w_real = jnp.log(-w_real).astype(jnp.float32)  # real_type == 'exp'
        self.w_imag = jnp.imag(w).astype(jnp.float32)

        self.l_max = L
        self.L = 0

    # ---- A diagonal part -----------------------------------------------------
    def _w(self):
        w_real = -jnp.exp(self.inv_w_real)
        return jax.lax.complex(w_real, self.w_imag)             # (S, N) complex64

    # ---- linear-step parameters ----------------------------------------------
    def _setup_linear(self):
        w = jnp.tile(self._w(), (self.broadcast, 1))            # (H, N)
        Bm = jnp.tile(self.B, (1, self.broadcast, 1))           # (1, H, N)
        Pm = jnp.tile(self.P, (1, self.broadcast, 1))           # (R, H, N)
        Qm = jnp.conj(Pm)
        dt = jnp.exp(self.log_dt)                               # (H,)
        D = 1.0 / (2.0 / dt[:, None] - w)                       # (H, N)
        Rm = jnp.eye(self.rank, dtype=w.dtype) + 2 * jnp.real(
            jnp.einsum("rhn,hn,shn->hrs", Qm, D, Pm))
        Q_D = jnp.transpose(Qm * D, (1, 0, 2))                  # (H, R, N)
        if self.rank == 1:
            Rs = Q_D / Rm                                       # (H,1,1) broadcast-solve
        else:
            Rs = jnp.linalg.solve(Rm.astype(Q_D.dtype), Q_D)
        Rs = jnp.transpose(Rs, (1, 0, 2))                       # (R, H, N)
        self.step_params = dict(D=D, R=Rs, P=Pm, Q=Qm, B=Bm, E=2.0 / dt[:, None] + w)

    def _setup_state(self):
        self._setup_linear()
        sp = self.step_params
        N2 = 2 * self.N
        # dA: linear step applied to the (2N x 2N) identity (conjugate-doubled params).
        D2, E2 = _conj(sp["D"]), _conj(sp["E"])                 # (H, 2N)
        P2, Q2, R2 = _conj(sp["P"]), _conj(sp["Q"]), _conj(sp["R"])  # (R, H, 2N)
        state = jnp.eye(N2, dtype=jnp.complex64)[:, None, :]    # (2N, 1, 2N)
        state = jnp.broadcast_to(state, (N2, self.H, N2))
        ns = E2 * state - jnp.einsum("rhn,rhm,bhm->bhn", P2, Q2, state)
        ns = D2 * (ns - jnp.einsum("rhn,rhm,bhm->bhn", P2, R2, ns))
        dA = jnp.transpose(ns, (1, 2, 0))                       # (H, 2N, 2N)
        # dB: linear step with u = ones, zero state (half-size path).
        u = jnp.ones((self.H,), jnp.complex64)
        nsb = 2.0 * sp["B"] * u[:, None]                        # (1, H, N)
        corr = jnp.einsum("rhn,rhm,bhm->bhn",
                          _conj(sp["P"]), _conj(sp["R"]), _conj(nsb))[..., :self.N]
        nsb = sp["D"] * (nsb - corr)
        dB = _conj(nsb)[0]                                      # (H, 2N)
        return dA, dB

    def _setup_C(self, L):
        if self.L == 0:
            double_length = False
        elif L > self.L:
            double_length = True
            L = self.L
        else:
            return
        dA, _ = self._setup_state()
        dA_L = _matrix_power(dA, L)                             # (H, 2N, 2N)
        C_ = _conj(self.C)                                      # (channels, H, 2N)
        prod = jnp.einsum("hnm,chn->chm", dA_L, C_)             # dA_L^T contraction
        if double_length:
            prod = -prod
        C_ = C_ - prod
        self.C = C_[..., :self.N]
        self.L = 2 * self.L if double_length else self.L + L

    def _omega(self, L):
        # Computed in float64 (numpy) then cast: the Nyquist bin has 1+omega ~ 1e-16,
        # so z is huge but finite — avoids inf/NaN through the approx-reciprocal path.
        idx = np.arange(L // 2 + 1)
        omega64 = np.exp(-2j * np.pi * idx / L)                 # complex128
        z64 = 2.0 * (1.0 - omega64) / (1.0 + omega64)
        omega = jnp.asarray(omega64.astype(np.complex64))
        z = jnp.asarray(z64.astype(np.complex64))
        return omega, z

    # ---- forward ---------------------------------------------------------------
    def forward(self, state=None, rate=1.0, L=None):
        # TODO(synk): bandlimit mask and the state-input branch (k_state) are not
        # implemented; this forward covers state=None (the default usage), rank==1/2+.
        assert state is None
        if self.L == 0 and self.l_max is not None and self.l_max > 0:
            self._setup_C(self.l_max)
        if L is None:
            L = round(self.L / rate)
        continuous_L = round(rate * L)
        while continuous_L > self.L:
            self._setup_C(continuous_L)
        discrete_L = round(self.L / rate)

        dt = jnp.exp(self.log_dt) * rate                        # (H,)
        B = jnp.tile(self.B, (1, self.broadcast, 1))            # (1, H, N)
        P = jnp.tile(self.P, (1, self.broadcast, 1))            # (R, H, N)
        Q = jnp.tile(jnp.conj(self.P), (1, self.broadcast, 1))  # (R, H, N)
        w = jnp.tile(self._w(), (self.broadcast, 1))            # (H, N)
        C = self.C                                              # (channels, H, N)

        omega, z = self._omega(discrete_L)                      # (F,), F = L//2+1

        w = w * dt[:, None]                                     # discretized poles
        Bc = jnp.concatenate([B, P], axis=-3)                   # (1+R, H, N)
        Cc = jnp.concatenate([C, Q], axis=-3)                   # (channels+R, H, N)
        v = Bc[:, None, :, :] * Cc[None, :, :, :]               # (A, Cd, H, N)
        # Fold the per-H dt post-scale into v (r is linear in v): touches only
        # AC*H*N elements instead of a full HBM read+write over the (A,Cd,H,F) result.
        v = v * dt[None, None, :, None]

        # conjugate-symmetric Cauchy reduction -> Pallas hot path (fusion inside kernel)
        r = cauchy_pallas(v, z, w)                              # (A, Cd, H, F)

        if self.rank == 1:
            k_f = (r[:-1, :-1, :, :]
                   - r[:-1, -1:, :, :] * r[-1:, :-1, :, :] / (1 + r[-1:, -1:, :, :]))
        else:
            R_ = self.rank
            r00 = r[:-R_, :-R_]
            r01 = r[:-R_, -R_:]
            r10 = r[-R_:, :-R_]
            r11 = jnp.transpose(r[-R_:, -R_:], (2, 3, 0, 1))
            r11 = jnp.linalg.inv(jnp.eye(R_, dtype=r.dtype) + r11)
            r11 = jnp.transpose(r11, (2, 3, 0, 1))
            k_f = r00 - jnp.einsum("ijhn,jkhn,klhn->ilhn", r01, r11, r10)

        k_f = k_f * 2 / (1 + omega)
        # TODO(synk): inverse real FFT has no Pallas primitive; done with jnp.fft in glue.
        k = jnp.fft.irfft(k_f, n=discrete_L, axis=-1)
        k = k[..., :L]
        k_B = k[-1, :, :, :]                                    # (channels, H, L)
        return k_B, None


# ----------------------------------------------------------------------------
if __name__ == "__main__":
    # --- standalone check of the Pallas Cauchy kernel against a pure-jnp reference ---
    kc = jax.random.split(jax.random.PRNGKey(1), 4)
    Av, Cv, Hv, Nv, Fv = 2, 2, 5, 6, 9
    vtest = jax.lax.complex(jax.random.normal(kc[0], (Av, Cv, Hv, Nv), jnp.float32),
                            jax.random.normal(kc[1], (Av, Cv, Hv, Nv), jnp.float32))
    wtest = jax.lax.complex(-(0.1 + jax.random.uniform(kc[2], (Hv, Nv), jnp.float32)),
                            jax.random.normal(kc[3], (Hv, Nv), jnp.float32))
    ztest = jax.lax.complex(jnp.zeros((Fv,), jnp.float32),
                            jnp.linspace(0.0, 3.0, Fv).astype(jnp.float32))
    r_pl = jax.block_until_ready(cauchy_pallas(vtest, ztest, wtest))
    r_rf = _cauchy_ref(vtest, ztest, wtest)
    rel_err = float(jnp.max(jnp.abs(r_pl - r_rf)) / (jnp.max(jnp.abs(r_rf)) + 1e-6))
    assert rel_err < 1e-3, rel_err

    # --- full SSKernelNPLR forward on small deterministic shapes ---
    N, H, S, R, CH = 4, 4, 2, 1, 1   # state/2, d_model, n_ssm, rank, channels
    l_max = 16

    key = jax.random.PRNGKey(0)
    k1, k2, k3, k4, k5, k6, k7 = jax.random.split(key, 7)

    w_real = -(0.1 + jax.random.uniform(k1, (S, N), jnp.float32))        # strictly negative
    w_imag = jnp.pi * jnp.broadcast_to(jnp.arange(N, dtype=jnp.float32), (S, N))
    w = jax.lax.complex(w_real, w_imag)                                   # (S, N)

    P = jax.lax.complex(0.5 * jax.random.normal(k2, (R, S, N), jnp.float32),
                        0.5 * jax.random.normal(k3, (R, S, N), jnp.float32))  # (R, S, N)
    B = jax.lax.complex(jax.random.normal(k4, (S, N), jnp.float32),
                        jax.random.normal(k5, (S, N), jnp.float32))           # (S, N)
    C = jax.lax.complex(jax.random.normal(k6, (CH, H, N), jnp.float32),
                        jax.random.normal(k7, (CH, H, N), jnp.float32))       # (CH, H, N)
    log_dt = jnp.linspace(math.log(1e-3), math.log(1e-1), H).astype(jnp.float32)  # (H,)

    kernel = SSKernelNPLRJax(w, P, B, C, log_dt, L=l_max)
    k_B, k_state = kernel.forward(state=None, rate=1.0, L=None)
    k_B = jax.block_until_ready(k_B)

    assert k_B.shape == (CH, H, l_max), k_B.shape
    assert k_state is None
    assert bool(jnp.all(jnp.isfinite(k_B)))
    print("KERNEL_OK")
</pallas_src>

<mosaic_0001>
module attributes {stable_mosaic.version = 11 : i64} {
  func.func @kernel(%arg0: i32, %arg1: i32, %arg2: memref<4x8x6xf32, #tpu.memory_space<vmem>>, %arg3: memref<4x8x6xf32, #tpu.memory_space<vmem>>, %arg4: memref<8x6xf32, #tpu.memory_space<vmem>>, %arg5: memref<8x6xf32, #tpu.memory_space<vmem>>, %arg6: memref<1x128xf32, #tpu.memory_space<vmem>>, %arg7: memref<1x128xf32, #tpu.memory_space<vmem>>, %arg8: memref<4x8x128xf32, #tpu.memory_space<vmem>>, %arg9: memref<4x8x128xf32, #tpu.memory_space<vmem>>) attributes {dimension_semantics = [#tpu.dimension_semantics<parallel>, #tpu.dimension_semantics<parallel>], iteration_bounds = array<i64: 1, 1>, scalar_prefetch = 0 : i64, scratch_operands = 0 : i64, tpu.core_type = #tpu.core_type<tc>, window_params = [{transform_indices = @transform_0, window_bounds = array<i64: 4, 8, 6>}, {transform_indices = @transform_1, window_bounds = array<i64: 4, 8, 6>}, {transform_indices = @transform_2, window_bounds = array<i64: 8, 6>}, {transform_indices = @transform_3, window_bounds = array<i64: 8, 6>}, {transform_indices = @transform_4, window_bounds = array<i64: 1, 128>}, {transform_indices = @transform_5, window_bounds = array<i64: 1, 128>}, {transform_indices = @transform_6, window_bounds = array<i64: 4, 8, 128>}, {transform_indices = @transform_7, window_bounds = array<i64: 4, 8, 128>}]} {
    %c0 = arith.constant 0 : index
    %c0_0 = arith.constant 0 : index
    %0 = vector.load %arg6[%c0, %c0_0] : memref<1x128xf32, #tpu.memory_space<vmem>>, vector<1x128xf32>
    %c0_1 = arith.constant 0 : index
    %c0_2 = arith.constant 0 : index
    %1 = vector.load %arg7[%c0_1, %c0_2] : memref<1x128xf32, #tpu.memory_space<vmem>>, vector<1x128xf32>
    %c0_i32 = arith.constant 0 : i32
    %c1_i32 = arith.constant 1 : i32
    %2 = arith.muli %c0_i32, %c1_i32 : i32
    %c0_i32_3 = arith.constant 0 : i32
    %3 = arith.addi %c0_i32_3, %2 : i32
    %c8_i32 = arith.constant 8 : i32
    %4 = arith.muli %3, %c8_i32 : i32
    %5 = tpu.assume_multiple %4, 8 : i32
    %cst = arith.constant 0.000000e+00 : f32
    %6 = vector.broadcast %cst : f32 to vector<8x128xf32>
    %cst_4 = arith.constant 0.000000e+00 : f32
    %7 = vector.broadcast %cst_4 : f32 to vector<8x128xf32>
    %cst_5 = arith.constant 0.000000e+00 : f32
    %8 = vector.broadcast %cst_5 : f32 to vector<8x128xf32>
    %cst_6 = arith.constant 0.000000e+00 : f32
    %9 = vector.broadcast %cst_6 : f32 to vector<8x128xf32>
    %cst_7 = arith.constant 0.000000e+00 : f32
    %10 = vector.broadcast %cst_7 : f32 to vector<8x128xf32>
    %cst_8 = arith.constant 0.000000e+00 : f32
    %11 = vector.broadcast %cst_8 : f32 to vector<8x128xf32>
    %cst_9 = arith.constant 0.000000e+00 : f32
    %12 = vector.broadcast %cst_9 : f32 to vector<8x128xf32>
    %cst_10 = arith.constant 0.000000e+00 : f32
    %13 = vector.broadcast %cst_10 : f32 to vector<8x128xf32>
    %14 = arith.index_cast %5 : i32 to index
    %c0_11 = arith.constant 0 : index
    %15 = vector.load %arg4[%14, %c0_11] : memref<8x6xf32, #tpu.memory_space<vmem>>, vector<8x1xf32>
    %16 = arith.index_cast %5 : i32 to index
    %c0_12 = arith.constant 0 : index
    %17 = vector.load %arg5[%16, %c0_12] : memref<8x6xf32, #tpu.memory_space<vmem>>, vector<8x1xf32>
    %18 = vector.broadcast %0 : vector<1x128xf32> to vector<8x128xf32>
    %19 = vector.broadcast %15 : vector<8x1xf32> to vector<8x128xf32>
    %20 = arith.subf %18, %19 : vector<8x128xf32>
    %21 = vector.broadcast %1 : vector<1x128xf32> to vector<8x128xf32>
    %22 = vector.broadcast %17 : vector<8x1xf32> to vector<8x128xf32>
    %23 = arith.subf %21, %22 : vector<8x128xf32>
    %24 = vector.broadcast %1 : vector<1x128xf32> to vector<8x128xf32>
    %25 = vector.broadcast %17 : vector<8x1xf32> to vector<8x128xf32>
    %26 = arith.addf %24, %25 : vector<8x128xf32>
    %27 = arith.mulf %20, %20 : vector<8x128xf32>
    %28 = arith.mulf %23, %23 : vector<8x128xf32>
    %29 = arith.addf %27, %28 : vector<8x128xf32>
    %30 = arith.mulf %26, %26 : vector<8x128xf32>
    %31 = arith.addf %27, %30 : vector<8x128xf32>
    %32 = tpu.reciprocal %29 {approx = true} : vector<8x128xf32> -> vector<8x128xf32>
    %33 = tpu.reciprocal %31 {approx = true} : vector<8x128xf32> -> vector<8x128xf32>
    %34 = arith.mulf %29, %32 : vector<8x128xf32>
    %cst_13 = arith.constant 2.000000e+00 : f32
    %35 = vector.broadcast %cst_13 : f32 to vector<8x128xf32>
    %36 = arith.subf %35, %34 : vector<8x128xf32>
    %37 = arith.mulf %32, %36 : vector<8x128xf32>
    %38 = arith.mulf %31, %33 : vector<8x128xf32>
    %cst_14 = arith.constant 2.000000e+00 : f32
    %39 = vector.broadcast %cst_14 : f32 to vector<8x128xf32>
    %40 = arith.subf %39, %38 : vector<8x128xf32>
    %41 = arith.mulf %33, %40 : vector<8x128xf32>
    %42 = arith.mulf %20, %37 : vector<8x128xf32>
    %43 = arith.mulf %20, %41 : vector<8x128xf32>
    %44 = arith.mulf %23, %37 : vector<8x128xf32>
    %45 = arith.mulf %26, %41 : vector<8x128xf32>
    %46 = arith.addf %42, %43 : vector<8x128xf32>
    %47 = arith.subf %44, %45 : vector<8x128xf32>
    %48 = arith.subf %42, %43 : vector<8x128xf32>
    %49 = arith.addf %44, %45 : vector<8x128xf32>
    %c0_15 = arith.constant 0 : index
    %50 = arith.index_cast %5 : i32 to index
    %c0_16 = arith.constant 0 : index
    %51 = vector.load %arg2[%c0_15, %50, %c0_16] : memref<4x8x6xf32, #tpu.memory_space<vmem>>, vector<1x8x1xf32>
    %52 = vector.shape_cast %51 : vector<1x8x1xf32> to vector<8x1xf32>
    %c0_17 = arith.constant 0 : index
    %53 = arith.index_cast %5 : i32 to index
    %c0_18 = arith.constant 0 : index
    %54 = vector.load %arg3[%c0_17, %53, %c0_18] : memref<4x8x6xf32, #tpu.memory_space<vmem>>, vector<1x8x1xf32>
    %55 = vector.shape_cast %54 : vector<1x8x1xf32> to vector<8x1xf32>
    %56 = vector.broadcast %52 : vector<8x1xf32> to vector<8x128xf32>
    %57 = arith.mulf %56, %46 : vector<8x128xf32>
    %58 = vector.broadcast %55 : vector<8x1xf32> to vector<8x128xf32>
    %59 = arith.mulf %58, %47 : vector<8x128xf32>
    %60 = arith.addf %57, %59 : vector<8x128xf32>
    %61 = arith.addf %6, %60 : vector<8x128xf32>
    %62 = vector.broadcast %55 : vector<8x1xf32> to vector<8x128xf32>
    %63 = arith.mulf %62, %48 : vector<8x128xf32>
    %64 = vector.broadcast %52 : vector<8x1xf32> to vector<8x128xf32>
    %65 = arith.mulf %64, %49 : vector<8x128xf32>
    %66 = arith.subf %63, %65 : vector<8x128xf32>
    %67 = arith.addf %10, %66 : vector<8x128xf32>
    %c1 = arith.constant 1 : index
    %68 = arith.index_cast %5 : i32 to index
    %c0_19 = arith.constant 0 : index
    %69 = vector.load %arg2[%c1, %68, %c0_19] : memref<4x8x6xf32, #tpu.memory_space<vmem>>, vector<1x8x1xf32>
    %70 = vector.shape_cast %69 : vector<1x8x1xf32> to vector<8x1xf32>
    %c1_20 = arith.constant 1 : index
    %71 = arith.index_cast %5 : i32 to index
    %c0_21 = arith.constant 0 : index
    %72 = vector.load %arg3[%c1_20, %71, %c0_21] : memref<4x8x6xf32, #tpu.memory_space<vmem>>, vector<1x8x1xf32>
    %73 = vector.shape_cast %72 : vector<1x8x1xf32> to vector<8x1xf32>
    %74 = vector.broadcast %70 : vector<8x1xf32> to vector<8x128xf32>
    %75 = arith.mulf %74, %46 : vector<8x128xf32>
    %76 = vector.broadcast %73 : vector<8x1xf32> to vector<8x128xf32>
    %77 = arith.mulf %76, %47 : vector<8x128xf32>
    %78 = arith.addf %75, %77 : vector<8x128xf32>
    %79 = arith.addf %7, %78 : vector<8x128xf32>
    %80 = vector.broadcast %73 : vector<8x1xf32> to vector<8x128xf32>
    %81 = arith.mulf %80, %48 : vector<8x128xf32>
    %82 = vector.broadcast %70 : vector<8x1xf32> to vector<8x128xf32>
    %83 = arith.mulf %82, %49 : vector<8x128xf32>
    %84 = arith.subf %81, %83 : vector<8x128xf32>
    %85 = arith.addf %11, %84 : vector<8x128xf32>
    %c2 = arith.constant 2 : index
    %86 = arith.index_cast %5 : i32 to index
    %c0_22 = arith.constant 0 : index
    %87 = vector.load %arg2[%c2, %86, %c0_22] : memref<4x8x6xf32, #tpu.memory_space<vmem>>, vector<1x8x1xf32>
    %88 = vector.shape_cast %87 : vector<1x8x1xf32> to vector<8x1xf32>
    %c2_23 = arith.constant 2 : index
    %89 = arith.index_cast %5 : i32 to index
    %c0_24 = arith.constant 0 : index
    %90 = vector.load %arg3[%c2_23, %89, %c0_24] : memref<4x8x6xf32, #tpu.memory_space<vmem>>, vector<1x8x1xf32>
    %91 = vector.shape_cast %90 : vector<1x8x1xf32> to vector<8x1xf32>
    %92 = vector.broadcast %88 : vector<8x1xf32> to vector<8x128xf32>
    %93 = arith.mulf %92, %46 : vector<8x128xf32>
    %94 = vector.broadcast %91 : vector<8x1xf32> to vector<8x128xf32>
    %95 = arith.mulf %94, %47 : vector<8x128xf32>
    %96 = arith.addf %93, %95 : vector<8x128xf32>
    %97 = arith.addf %8, %96 : vector<8x128xf32>
    %98 = vector.broadcast %91 : vector<8x1xf32> to vector<8x128xf32>
    %99 = arith.mulf %98, %48 : vector<8x128xf32>
    %100 = vector.broadcast %88 : vector<8x1xf32> to vector<8x128xf32>
    %101 = arith.mulf %100, %49 : vector<8x128xf32>
    %102 = arith.subf %99, %101 : vector<8x128xf32>
    %103 = arith.addf %12, %102 : vector<8x128xf32>
    %c3 = arith.constant 3 : index
    %104 = arith.index_cast %5 : i32 to index
    %c0_25 = arith.constant 0 : index
    %105 = vector.load %arg2[%c3, %104, %c0_25] : memref<4x8x6xf32, #tpu.memory_space<vmem>>, vector<1x8x1xf32>
    %106 = vector.shape_cast %105 : vector<1x8x1xf32> to vector<8x1xf32>
    %c3_26 = arith.constant 3 : index
    %107 = arith.index_cast %5 : i32 to index
    %c0_27 = arith.constant 0 : index
    %108 = vector.load %arg3[%c3_26, %107, %c0_27] : memref<4x8x6xf32, #tpu.memory_space<vmem>>, vector<1x8x1xf32>
    %109 = vector.shape_cast %108 : vector<1x8x1xf32> to vector<8x1xf32>
    %110 = vector.broadcast %106 : vector<8x1xf32> to vector<8x128xf32>
    %111 = arith.mulf %110, %46 : vector<8x128xf32>
    %112 = vector.broadcast %109 : vector<8x1xf32> to vector<8x128xf32>
    %113 = arith.mulf %112, %47 : vector<8x128xf32>
    %114 = arith.addf %111, %113 : vector<8x128xf32>
    %115 = arith.addf %9, %114 : vector<8x128xf32>
    %116 = vector.broadcast %109 : vector<8x1xf32> to vector<8x128xf32>
    %117 = arith.mulf %116, %48 : vector<8x128xf32>
    %118 = vector.broadcast %106 : vector<8x1xf32> to vector<8x128xf32>
    %119 = arith.mulf %118, %49 : vector<8x128xf32>
    %120 = arith.subf %117, %119 : vector<8x128xf32>
    %121 = arith.addf %13, %120 : vector<8x128xf32>
    %122 = arith.index_cast %5 : i32 to index
    %c1_28 = arith.constant 1 : index
    %123 = vector.load %arg4[%122, %c1_28] : memref<8x6xf32, #tpu.memory_space<vmem>>, vector<8x1xf32>
    %124 = arith.index_cast %5 : i32 to index
    %c1_29 = arith.constant 1 : index
    %125 = vector.load %arg5[%124, %c1_29] : memref<8x6xf32, #tpu.memory_space<vmem>>, vector<8x1xf32>
    %126 = vector.broadcast %0 : vector<1x128xf32> to vector<8x128xf32>
    %127 = vector.broadcast %123 : vector<8x1xf32> to vector<8x128xf32>
    %128 = arith.subf %126, %127 : vector<8x128xf32>
    %129 = vector.broadcast %1 : vector<1x128xf32> to vector<8x128xf32>
    %130 = vector.broadcast %125 : vector<8x1xf32> to vector<8x128xf32>
    %131 = arith.subf %129, %130 : vector<8x128xf32>
    %132 = vector.broadcast %1 : vector<1x128xf32> to vector<8x128xf32>
    %133 = vector.broadcast %125 : vector<8x1xf32> to vector<8x128xf32>
    %134 = arith.addf %132, %133 : vector<8x128xf32>
    %135 = arith.mulf %128, %128 : vector<8x128xf32>
    %136 = arith.mulf %131, %131 : vector<8x128xf32>
    %137 = arith.addf %135, %136 : vector<8x128xf32>
    %138 = arith.mulf %134, %134 : vector<8x128xf32>
    %139 = arith.addf %135, %138 : vector<8x128xf32>
    %140 = tpu.reciprocal %137 {approx = true} : vector<8x128xf32> -> vector<8x128xf32>
    %141 = tpu.reciprocal %139 {approx = true} : vector<8x128xf32> -> vector<8x128xf32>
    %142 = arith.mulf %137, %140 : vector<8x128xf32>
    %cst_30 = arith.constant 2.000000e+00 : f32
    %143 = vector.broadcast %cst_30 : f32 to vector<8x128xf32>
    %144 = arith.subf %143, %142 : vector<8x128xf32>
    %145 = arith.mulf %140, %144 : vector<8x128xf32>
    %146 = arith.mulf %139, %141 : vector<8x128xf32>
    %cst_31 = arith.constant 2.000000e+00 : f32
    %147 = vector.broadcast %cst_31 : f32 to vector<8x128xf32>
    %148 = arith.subf %147, %146 : vector<8x128xf32>
    %149 = arith.mulf %141, %148 : vector<8x128xf32>
    %150 = arith.mulf %128, %145 : vector<8x128xf32>
    %151 = arith.mulf %128, %149 : vector<8x128xf32>
    %152 = arith.mulf %131, %145 : vector<8x128xf32>
    %153 = arith.mulf %134, %149 : vector<8x128xf32>
    %154 = arith.addf %150, %151 : vector<8x128xf32>
    %155 = arith.subf %152, %153 : vector<8x128xf32>
    %156 = arith.subf %150, %151 : vector<8x128xf32>
    %157 = arith.addf %152, %153 : vector<8x128xf32>
    %c0_32 = arith.constant 0 : index
    %158 = arith.index_cast %5 : i32 to index
    %c1_33 = arith.constant 1 : index
    %159 = vector.load %arg2[%c0_32, %158, %c1_33] : memref<4x8x6xf32, #tpu.memory_space<vmem>>, vector<1x8x1xf32>
    %160 = vector.shape_cast %159 : vector<1x8x1xf32> to vector<8x1xf32>
    %c0_34 = arith.constant 0 : index
    %161 = arith.index_cast %5 : i32 to index
    %c1_35 = arith.constant 1 : index
    %162 = vector.load %arg3[%c0_34, %161, %c1_35] : memref<4x8x6xf32, #tpu.memory_space<vmem>>, vector<1x8x1xf32>
    %163 = vector.shape_cast %162 : vector<1x8x1xf32> to vector<8x1xf32>
    %164 = vector.broadcast %160 : vector<8x1xf32> to vector<8x128xf32>
    %165 = arith.mulf %164, %154 : vector<8x128xf32>
    %166 = vector.broadcast %163 : vector<8x1xf32> to vector<8x128xf32>
    %167 = arith.mulf %166, %155 : vector<8x128xf32>
    %168 = arith.addf %165, %167 : vector<8x128xf32>
    %169 = arith.addf %61, %168 : vector<8x128xf32>
    %170 = vector.broadcast %163 : vector<8x1xf32> to vector<8x128xf32>
    %171 = arith.mulf %170, %156 : vector<8x128xf32>
    %172 = vector.broadcast %160 : vector<8x1xf32> to vector<8x128xf32>
    %173 = arith.mulf %172, %157 : vector<8x128xf32>
    %174 = arith.subf %171, %173 : vector<8x128xf32>
    %175 = arith.addf %67, %174 : vector<8x128xf32>
    %c1_36 = arith.constant 1 : index
    %176 = arith.index_cast %5 : i32 to index
    %c1_37 = arith.constant 1 : index
    %177 = vector.load %arg2[%c1_36, %176, %c1_37] : memref<4x8x6xf32, #tpu.memory_space<vmem>>, vector<1x8x1xf32>
    %178 = vector.shape_cast %177 : vector<1x8x1xf32> to vector<8x1xf32>
    %c1_38 = arith.constant 1 : index
    %179 = arith.index_cast %5 : i32 to index
    %c1_39 = arith.constant 1 : index
    %180 = vector.load %arg3[%c1_38, %179, %c1_39] : memref<4x8x6xf32, #tpu.memory_space<vmem>>, vector<1x8x1xf32>
    %181 = vector.shape_cast %180 : vector<1x8x1xf32> to vector<8x1xf32>
    %182 = vector.broadcast %178 : vector<8x1xf32> to vector<8x128xf32>
    %183 = arith.mulf %182, %154 : vector<8x128xf32>
    %184 = vector.broadcast %181 : vector<8x1xf32> to vector<8x128xf32>
    %185 = arith.mulf %184, %155 : vector<8x128xf32>
    %186 = arith.addf %183, %185 : vector<8x128xf32>
    %187 = arith.addf %79, %186 : vector<8x128xf32>
    %188 = vector.broadcast %181 : vector<8x1xf32> to vector<8x128xf32>
    %189 = arith.mulf %188, %156 : vector<8x128xf32>
    %190 = vector.broadcast %178 : vector<8x1xf32> to vector<8x128xf32>
    %191 = arith.mulf %190, %157 : vector<8x128xf32>
    %192 = arith.subf %189, %191 : vector<8x128xf32>
    %193 = arith.addf %85, %192 : vector<8x128xf32>
    %c2_40 = arith.constant 2 : index
    %194 = arith.index_cast %5 : i32 to index
    %c1_41 = arith.constant 1 : index
    %195 = vector.load %arg2[%c2_40, %194, %c1_41] : memref<4x8x6xf32, #tpu.memory_space<vmem>>, vector<1x8x1xf32>
    %196 = vector.shape_cast %195 : vector<1x8x1xf32> to vector<8x1xf32>
    %c2_42 = arith.constant 2 : index
    %197 = arith.index_cast %5 : i32 to index
    %c1_43 = arith.constant 1 : index
    %198 = vector.load %arg3[%c2_42, %197, %c1_43] : memref<4x8x6xf32, #tpu.memory_space<vmem>>, vector<1x8x1xf32>
    %199 = vector.shape_cast %198 : vector<1x8x1xf32> to vector<8x1xf32>
    %200 = vector.broadcast %196 : vector<8x1xf32> to vector<8x128xf32>
    %201 = arith.mulf %200, %154 : vector<8x128xf32>
    %202 = vector.broadcast %199 : vector<8x1xf32> to vector<8x128xf32>
    %203 = arith.mulf %202, %155 : vector<8x128xf32>
    %204 = arith.addf %201, %203 : vector<8x128xf32>
    %205 = arith.addf %97, %204 : vector<8x128xf32>
    %206 = vector.broadcast %199 : vector<8x1xf32> to vector<8x128xf32>
    %207 = arith.mulf %206, %156 : vector<8x128xf32>
    %208 = vector.broadcast %196 : vector<8x1xf32> to vector<8x128xf32>
    %209 = arith.mulf %208, %157 : vector<8x128xf32>
    %210 = arith.subf %207, %209 : vector<8x128xf32>
    %211 = arith.addf %103, %210 : vector<8x128xf32>
    %c3_44 = arith.constant 3 : index
    %212 = arith.index_cast %5 : i32 to index
    %c1_45 = arith.constant 1 : index
    %213 = vector.load %arg2[%c3_44, %212, %c1_45] : memref<4x8x6xf32, #tpu.memory_space<vmem>>, vector<1x8x1xf32>
    %214 = vector.shape_cast %213 : vector<1x8x1xf32> to vector<8x1xf32>
    %c3_46 = arith.constant 3 : index
    %215 = arith.index_cast %5 : i32 to index
    %c1_47 = arith.constant 1 : index
    %216 = vector.load %arg3[%c3_46, %215, %c1_47] : memref<4x8x6xf32, #tpu.memory_space<vmem>>, vector<1x8x1xf32>
    %217 = vector.shape_cast %216 : vector<1x8x1xf32> to vector<8x1xf32>
    %218 = vector.broadcast %214 : vector<8x1xf32> to vector<8x128xf32>
    %219 = arith.mulf %218, %154 : vector<8x128xf32>
    %220 = vector.broadcast %217 : vector<8x1xf32> to vector<8x128xf32>
    %221 = arith.mulf %220, %155 : vector<8x128xf32>
    %222 = arith.addf %219, %221 : vector<8x128xf32>
    %223 = arith.addf %115, %222 : vector<8x128xf32>
    %224 = vector.broadcast %217 : vector<8x1xf32> to vector<8x128xf32>
    %225 = arith.mulf %224, %156 : vector<8x128xf32>
    %226 = vector.broadcast %214 : vector<8x1xf32> to vector<8x128xf32>
    %227 = arith.mulf %226, %157 : vector<8x128xf32>
    %228 = arith.subf %225, %227 : vector<8x128xf32>
    %229 = arith.addf %121, %228 : vector<8x128xf32>
    %230 = arith.index_cast %5 : i32 to index
    %c2_48 = arith.constant 2 : index
    %231 = vector.load %arg4[%230, %c2_48] : memref<8x6xf32, #tpu.memory_space<vmem>>, vector<8x1xf32>
    %232 = arith.index_cast %5 : i32 to index
    %c2_49 = arith.constant 2 : index
    %233 = vector.load %arg5[%232, %c2_49] : memref<8x6xf32, #tpu.memory_space<vmem>>, vector<8x1xf32>
    %234 = vector.broadcast %0 : vector<1x128xf32> to vector<8x128xf32>
    %235 = vector.broadcast %231 : vector<8x1xf32> to vector<8x128xf32>
    %236 = arith.subf %234, %235 : vector<8x128xf32>
    %237 = vector.broadcast %1 : vector<1x128xf32> to vector<8x128xf32>
    %238 = vector.broadcast %233 : vector<8x1xf32> to vector<8x128xf32>
    %239 = arith.subf %237, %238 : vector<8x128xf32>
    %240 = vector.broadcast %1 : vector<1x128xf32> to vector<8x128xf32>
    %241 = vector.broadcast %233 : vector<8x1xf32> to vector<8x128xf32>
    %242 = arith.addf %240, %241 : vector<8x128xf32>
    %243 = arith.mulf %236, %236 : vector<8x128xf32>
    %244 = arith.mulf %239, %239 : vector<8x128xf32>
    %245 = arith.addf %243, %244 : vector<8x128xf32>
    %246 = arith.mulf %242, %242 : vector<8x128xf32>
    %247 = arith.addf %243, %246 : vector<8x128xf32>
    %248 = tpu.reciprocal %245 {approx = true} : vector<8x128xf32> -> vector<8x128xf32>
    %249 = tpu.reciprocal %247 {approx = true} : vector<8x128xf32> -> vector<8x128xf32>
    %250 = arith.mulf %245, %248 : vector<8x128xf32>
    %cst_50 = arith.constant 2.000000e+00 : f32
    %251 = vector.broadcast %cst_50 : f32 to vector<8x128xf32>
    %252 = arith.subf %251, %250 : vector<8x128xf32>
    %253 = arith.mulf %248, %252 : vector<8x128xf32>
    %254 = arith.mulf %247, %249 : vector<8x128xf32>
    %cst_51 = arith.constant 2.000000e+00 : f32
    %255 = vector.broadcast %cst_51 : f32 to vector<8x128xf32>
    %256 = arith.subf %255, %254 : vector<8x128xf32>
    %257 = arith.mulf %249, %256 : vector<8x128xf32>
    %258 = arith.mulf %236, %253 : vector<8x128xf32>
    %259 = arith.mulf %236, %257 : vector<8x128xf32>
    %260 = arith.mulf %239, %253 : vector<8x128xf32>
    %261 = arith.mulf %242, %257 : vector<8x128xf32>
    %262 = arith.addf %258, %259 : vector<8x128xf32>
    %263 = arith.subf %260, %261 : vector<8x128xf32>
    %264 = arith.subf %258, %259 : vector<8x128xf32>
    %265 = arith.addf %260, %261 : vector<8x128xf32>
    %c0_52 = arith.constant 0 : index
    %266 = arith.index_cast %5 : i32 to index
    %c2_53 = arith.constant 2 : index
    %267 = vector.load %arg2[%c0_52, %266, %c2_53] : memref<4x8x6xf32, #tpu.memory_space<vmem>>, vector<1x8x1xf32>
    %268 = vector.shape_cast %267 : vector<1x8x1xf32> to vector<8x1xf32>
    %c0_54 = arith.constant 0 : index
    %269 = arith.index_cast %5 : i32 to index
    %c2_55 = arith.constant 2 : index
    %270 = vector.load %arg3[%c0_54, %269, %c2_55] : memref<4x8x6xf32, #tpu.memory_space<vmem>>, vector<1x8x1xf32>
    %271 = vector.shape_cast %270 : vector<1x8x1xf32> to vector<8x1xf32>
    %272 = vector.broadcast %268 : vector<8x1xf32> to vector<8x128xf32>
    %273 = arith.mulf %272, %262 : vector<8x128xf32>
    %274 = vector.broadcast %271 : vector<8x1xf32> to vector<8x128xf32>
    %275 = arith.mulf %274, %263 : vector<8x128xf32>
    %276 = arith.addf %273, %275 : vector<8x128xf32>
    %277 = arith.addf %169, %276 : vector<8x128xf32>
    %278 = vector.broadcast %271 : vector<8x1xf32> to vector<8x128xf32>
    %279 = arith.mulf %278, %264 : vector<8x128xf32>
    %280 = vector.broadcast %268 : vector<8x1xf32> to vector<8x128xf32>
    %281 = arith.mulf %280, %265 : vector<8x128xf32>
    %282 = arith.subf %279, %281 : vector<8x128xf32>
    %283 = arith.addf %175, %282 : vector<8x128xf32>
    %c1_56 = arith.constant 1 : index
    %284 = arith.index_cast %5 : i32 to index
    %c2_57 = arith.constant 2 : index
    %285 = vector.load %arg2[%c1_56, %284, %c2_57] : memref<4x8x6xf32, #tpu.memory_space<vmem>>, vector<1x8x1xf32>
    %286 = vector.shape_cast %285 : vector<1x8x1xf32> to vector<8x1xf32>
    %c1_58 = arith.constant 1 : index
    %287 = arith.index_cast %5 : i32 to index
    %c2_59 = arith.constant 2 : index
    %288 = vector.load %arg3[%c1_58, %287, %c2_59] : memref<4x8x6xf32, #tpu.memory_space<vmem>>, vector<1x8x1xf32>
    %289 = vector.shape_cast %288 : vector<1x8x1xf32> to vector<8x1xf32>
    %290 = vector.broadcast %286 : vector<8x1xf32> to vector<8x128xf32>
    %291 = arith.mulf %290, %262 : vector<8x128xf32>
    %292 = vector.broadcast %289 : vector<8x1xf32> to vector<8x128xf32>
    %293 = arith.mulf %292, %263 : vector<8x128xf32>
    %294 = arith.addf %291, %293 : vector<8x128xf32>
    %295 = arith.addf %187, %294 : vector<8x128xf32>
    %296 = vector.broadcast %289 : vector<8x1xf32> to vector<8x128xf32>
    %297 = arith.mulf %296, %264 : vector<8x128xf32>
    %298 = vector.broadcast %286 : vector<8x1xf32> to vector<8x128xf32>
    %299 = arith.mulf %298, %265 : vector<8x128xf32>
    %300 = arith.subf %297, %299 : vector<8x128xf32>
    %301 = arith.addf %193, %300 : vector<8x128xf32>
    %c2_60 = arith.constant 2 : index
    %302 = arith.index_cast %5 : i32 to index
    %c2_61 = arith.constant 2 : index
    %303 = vector.load %arg2[%c2_60, %302, %c2_61] : memref<4x8x6xf32, #tpu.memory_space<vmem>>, vector<1x8x1xf32>
    %304 = vector.shape_cast %303 : vector<1x8x1xf32> to vector<8x1xf32>
    %c2_62 = arith.constant 2 : index
    %305 = arith.index_cast %5 : i32 to index
    %c2_63 = arith.constant 2 : index
    %306 = vector.load %arg3[%c2_62, %305, %c2_63] : memref<4x8x6xf32, #tpu.memory_space<vmem>>, vector<1x8x1xf32>
    %307 = vector.shape_cast %306 : vector<1x8x1xf32> to vector<8x1xf32>
    %308 = vector.broadcast %304 : vector<8x1xf32> to vector<8x128xf32>
    %309 = arith.mulf %308, %262 : vector<8x128xf32>
    %310 = vector.broadcast %307 : vector<8x1xf32> to vector<8x128xf32>
    %311 = arith.mulf %310, %263 : vector<8x128xf32>
    %312 = arith.addf %309, %311 : vector<8x128xf32>
    %313 = arith.addf %205, %312 : vector<8x128xf32>
    %314 = vector.broadcast %307 : vector<8x1xf32> to vector<8x128xf32>
    %315 = arith.mulf %314, %264 : vector<8x128xf32>
    %316 = vector.broadcast %304 : vector<8x1xf32> to vector<8x128xf32>
    %317 = arith.mulf %316, %265 : vector<8x128xf32>
    %318 = arith.subf %315, %317 : vector<8x128xf32>
    %319 = arith.addf %211, %318 : vector<8x128xf32>
    %c3_64 = arith.constant 3 : index
    %320 = arith.index_cast %5 : i32 to index
    %c2_65 = arith.constant 2 : index
    %321 = vector.load %arg2[%c3_64, %320, %c2_65] : memref<4x8x6xf32, #tpu.memory_space<vmem>>, vector<1x8x1xf32>
    %322 = vector.shape_cast %321 : vector<1x8x1xf32> to vector<8x1xf32>
    %c3_66 = arith.constant 3 : index
    %323 = arith.index_cast %5 : i32 to index
    %c2_67 = arith.constant 2 : index
    %324 = vector.load %arg3[%c3_66, %323, %c2_67] : memref<4x8x6xf32, #tpu.memory_space<vmem>>, vector<1x8x1xf32>
    %325 = vector.shape_cast %324 : vector<1x8x1xf32> to vector<8x1xf32>
    %326 = vector.broadcast %322 : vector<8x1xf32> to vector<8x128xf32>
    %327 = arith.mulf %326, %262 : vector<8x128xf32>
    %328 = vector.broadcast %325 : vector<8x1xf32> to vector<8x128xf32>
    %329 = arith.mulf %328, %263 : vector<8x128xf32>
    %330 = arith.addf %327, %329 : vector<8x128xf32>
    %331 = arith.addf %223, %330 : vector<8x128xf32>
    %332 = vector.broadcast %325 : vector<8x1xf32> to vector<8x128xf32>
    %333 = arith.mulf %332, %264 : vector<8x128xf32>
    %334 = vector.broadcast %322 : vector<8x1xf32> to vector<8x128xf32>
    %335 = arith.mulf %334, %265 : vector<8x128xf32>
    %336 = arith.subf %333, %335 : vector<8x128xf32>
    %337 = arith.addf %229, %336 : vector<8x128xf32>
    %338 = arith.index_cast %5 : i32 to index
    %c3_68 = arith.constant 3 : index
    %339 = vector.load %arg4[%338, %c3_68] : memref<8x6xf32, #tpu.memory_space<vmem>>, vector<8x1xf32>
    %340 = arith.index_cast %5 : i32 to index
    %c3_69 = arith.constant 3 : index
    %341 = vector.load %arg5[%340, %c3_69] : memref<8x6xf32, #tpu.memory_space<vmem>>, vector<8x1xf32>
    %342 = vector.broadcast %0 : vector<1x128xf32> to vector<8x128xf32>
    %343 = vector.broadcast %339 : vector<8x1xf32> to vector<8x128xf32>
    %344 = arith.subf %342, %343 : vector<8x128xf32>
    %345 = vector.broadcast %1 : vector<1x128xf32> to vector<8x128xf32>
    %346 = vector.broadcast %341 : vector<8x1xf32> to vector<8x128xf32>
    %347 = arith.subf %345, %346 : vector<8x128xf32>
    %348 = vector.broadcast %1 : vector<1x128xf32> to vector<8x128xf32>
    %349 = vector.broadcast %341 : vector<8x1xf32> to vector<8x128xf32>
    %350 = arith.addf %348, %349 : vector<8x128xf32>
    %351 = arith.mulf %344, %344 : vector<8x128xf32>
    %352 = arith.mulf %347, %347 : vector<8x128xf32>
    %353 = arith.addf %351, %352 : vector<8x128xf32>
    %354 = arith.mulf %350, %350 : vector<8x128xf32>
    %355 = arith.addf %351, %354 : vector<8x128xf32>
    %356 = tpu.reciprocal %353 {approx = true} : vector<8x128xf32> -> vector<8x128xf32>
    %357 = tpu.reciprocal %355 {approx = true} : vector<8x128xf32> -> vector<8x128xf32>
    %358 = arith.mulf %353, %356 : vector<8x128xf32>
    %cst_70 = arith.constant 2.000000e+00 : f32
    %359 = vector.broadcast %cst_70 : f32 to vector<8x128xf32>
    %360 = arith.subf %359, %358 : vector<8x128xf32>
    %361 = arith.mulf %356, %360 : vector<8x128xf32>
    %362 = arith.mulf %355, %357 : vector<8x128xf32>
    %cst_71 = arith.constant 2.000000e+00 : f32
    %363 = vector.broadcast %cst_71 : f32 to vector<8x128xf32>
    %364 = arith.subf %363, %362 : vector<8x128xf32>
    %365 = arith.mulf %357, %364 : vector<8x128xf32>
    %366 = arith.mulf %344, %361 : vector<8x128xf32>
    %367 = arith.mulf %344, %365 : vector<8x128xf32>
    %368 = arith.mulf %347, %361 : vector<8x128xf32>
    %369 = arith.mulf %350, %365 : vector<8x128xf32>
    %370 = arith.addf %366, %367 : vector<8x128xf32>
    %371 = arith.subf %368, %369 : vector<8x128xf32>
    %372 = arith.subf %366, %367 : vector<8x128xf32>
    %373 = arith.addf %368, %369 : vector<8x128xf32>
    %c0_72 = arith.constant 0 : index
    %374 = arith.index_cast %5 : i32 to index
    %c3_73 = arith.constant 3 : index
    %375 = vector.load %arg2[%c0_72, %374, %c3_73] : memref<4x8x6xf32, #tpu.memory_space<vmem>>, vector<1x8x1xf32>
    %376 = vector.shape_cast %375 : vector<1x8x1xf32> to vector<8x1xf32>
    %c0_74 = arith.constant 0 : index
    %377 = arith.index_cast %5 : i32 to index
    %c3_75 = arith.constant 3 : index
    %378 = vector.load %arg3[%c0_74, %377, %c3_75] : memref<4x8x6xf32, #tpu.memory_space<vmem>>, vector<1x8x1xf32>
    %379 = vector.shape_cast %378 : vector<1x8x1xf32> to vector<8x1xf32>
    %380 = vector.broadcast %376 : vector<8x1xf32> to vector<8x128xf32>
    %381 = arith.mulf %380, %370 : vector<8x128xf32>
    %382 = vector.broadcast %379 : vector<8x1xf32> to vector<8x128xf32>
    %383 = arith.mulf %382, %371 : vector<8x128xf32>
    %384 = arith.addf %381, %383 : vector<8x128xf32>
    %385 = arith.addf %277, %384 : vector<8x128xf32>
    %386 = vector.broadcast %379 : vector<8x1xf32> to vector<8x128xf32>
    %387 = arith.mulf %386, %372 : vector<8x128xf32>
    %388 = vector.broadcast %376 : vector<8x1xf32> to vector<8x128xf32>
    %389 = arith.mulf %388, %373 : vector<8x128xf32>
    %390 = arith.subf %387, %389 : vector<8x128xf32>
    %391 = arith.addf %283, %390 : vector<8x128xf32>
    %c1_76 = arith.constant 1 : index
    %392 = arith.index_cast %5 : i32 to index
    %c3_77 = arith.constant 3 : index
    %393 = vector.load %arg2[%c1_76, %392, %c3_77] : memref<4x8x6xf32, #tpu.memory_space<vmem>>, vector<1x8x1xf32>
    %394 = vector.shape_cast %393 : vector<1x8x1xf32> to vector<8x1xf32>
    %c1_78 = arith.constant 1 : index
    %395 = arith.index_cast %5 : i32 to index
    %c3_79 = arith.constant 3 : index
    %396 = vector.load %arg3[%c1_78, %395, %c3_79] : memref<4x8x6xf32, #tpu.memory_space<vmem>>, vector<1x8x1xf32>
    %397 = vector.shape_cast %396 : vector<1x8x1xf32> to vector<8x1xf32>
    %398 = vector.broadcast %394 : vector<8x1xf32> to vector<8x128xf32>
    %399 = arith.mulf %398, %370 : vector<8x128xf32>
    %400 = vector.broadcast %397 : vector<8x1xf32> to vector<8x128xf32>
    %401 = arith.mulf %400, %371 : vector<8x128xf32>
    %402 = arith.addf %399, %401 : vector<8x128xf32>
    %403 = arith.addf %295, %402 : vector<8x128xf32>
    %404 = vector.broadcast %397 : vector<8x1xf32> to vector<8x128xf32>
    %405 = arith.mulf %404, %372 : vector<8x128xf32>
    %406 = vector.broadcast %394 : vector<8x1xf32> to vector<8x128xf32>
    %407 = arith.mulf %406, %373 : vector<8x128xf32>
    %408 = arith.subf %405, %407 : vector<8x128xf32>
    %409 = arith.addf %301, %408 : vector<8x128xf32>
    %c2_80 = arith.constant 2 : index
    %410 = arith.index_cast %5 : i32 to index
    %c3_81 = arith.constant 3 : index
    %411 = vector.load %arg2[%c2_80, %410, %c3_81] : memref<4x8x6xf32, #tpu.memory_space<vmem>>, vector<1x8x1xf32>
    %412 = vector.shape_cast %411 : vector<1x8x1xf32> to vector<8x1xf32>
    %c2_82 = arith.constant 2 : index
    %413 = arith.index_cast %5 : i32 to index
    %c3_83 = arith.constant 3 : index
    %414 = vector.load %arg3[%c2_82, %413, %c3_83] : memref<4x8x6xf32, #tpu.memory_space<vmem>>, vector<1x8x1xf32>
    %415 = vector.shape_cast %414 : vector<1x8x1xf32> to vector<8x1xf32>
    %416 = vector.broadcast %412 : vector<8x1xf32> to vector<8x128xf32>
    %417 = arith.mulf %416, %370 : vector<8x128xf32>
    %418 = vector.broadcast %415 : vector<8x1xf32> to vector<8x128xf32>
    %419 = arith.mulf %418, %371 : vector<8x128xf32>
    %420 = arith.addf %417, %419 : vector<8x128xf32>
    %421 = arith.addf %313, %420 : vector<8x128xf32>
    %422 = vector.broadcast %415 : vector<8x1xf32> to vector<8x128xf32>
    %423 = arith.mulf %422, %372 : vector<8x128xf32>
    %424 = vector.broadcast %412 : vector<8x1xf32> to vector<8x128xf32>
    %425 = arith.mulf %424, %373 : vector<8x128xf32>
    %426 = arith.subf %423, %425 : vector<8x128xf32>
    %427 = arith.addf %319, %426 : vector<8x128xf32>
    %c3_84 = arith.constant 3 : index
    %428 = arith.index_cast %5 : i32 to index
    %c3_85 = arith.constant 3 : index
    %429 = vector.load %arg2[%c3_84, %428, %c3_85] : memref<4x8x6xf32, #tpu.memory_space<vmem>>, vector<1x8x1xf32>
    %430 = vector.shape_cast %429 : vector<1x8x1xf32> to vector<8x1xf32>
    %c3_86 = arith.constant 3 : index
    %431 = arith.index_cast %5 : i32 to index
    %c3_87 = arith.constant 3 : index
    %432 = vector.load %arg3[%c3_86, %431, %c3_87] : memref<4x8x6xf32, #tpu.memory_space<vmem>>, vector<1x8x1xf32>
    %433 = vector.shape_cast %432 : vector<1x8x1xf32> to vector<8x1xf32>
    %434 = vector.broadcast %430 : vector<8x1xf32> to vector<8x128xf32>
    %435 = arith.mulf %434, %370 : vector<8x128xf32>
    %436 = vector.broadcast %433 : vector<8x1xf32> to vector<8x128xf32>
    %437 = arith.mulf %436, %371 : vector<8x128xf32>
    %438 = arith.addf %435, %437 : vector<8x128xf32>
    %439 = arith.addf %331, %438 : vector<8x128xf32>
    %440 = vector.broadcast %433 : vector<8x1xf32> to vector<8x128xf32>
    %441 = arith.mulf %440, %372 : vector<8x128xf32>
    %442 = vector.broadcast %430 : vector<8x1xf32> to vector<8x128xf32>
    %443 = arith.mulf %442, %373 : vector<8x128xf32>
    %444 = arith.subf %441, %443 : vector<8x128xf32>
    %445 = arith.addf %337, %444 : vector<8x128xf32>
    %446 = arith.index_cast %5 : i32 to index
    %c4 = arith.constant 4 : index
    %447 = vector.load %arg4[%446, %c4] : memref<8x6xf32, #tpu.memory_space<vmem>>, vector<8x1xf32>
    %448 = arith.index_cast %5 : i32 to index
    %c4_88 = arith.constant 4 : index
    %449 = vector.load %arg5[%448, %c4_88] : memref<8x6xf32, #tpu.memory_space<vmem>>, vector<8x1xf32>
    %450 = vector.broadcast %0 : vector<1x128xf32> to vector<8x128xf32>
    %451 = vector.broadcast %447 : vector<8x1xf32> to vector<8x128xf32>
    %452 = arith.subf %450, %451 : vector<8x128xf32>
    %453 = vector.broadcast %1 : vector<1x128xf32> to vector<8x128xf32>
    %454 = vector.broadcast %449 : vector<8x1xf32> to vector<8x128xf32>
    %455 = arith.subf %453, %454 : vector<8x128xf32>
    %456 = vector.broadcast %1 : vector<1x128xf32> to vector<8x128xf32>
    %457 = vector.broadcast %449 : vector<8x1xf32> to vector<8x128xf32>
    %458 = arith.addf %456, %457 : vector<8x128xf32>
    %459 = arith.mulf %452, %452 : vector<8x128xf32>
    %460 = arith.mulf %455, %455 : vector<8x128xf32>
    %461 = arith.addf %459, %460 : vector<8x128xf32>
    %462 = arith.mulf %458, %458 : vector<8x128xf32>
    %463 = arith.addf %459, %462 : vector<8x128xf32>
    %464 = tpu.reciprocal %461 {approx = true} : vector<8x128xf32> -> vector<8x128xf32>
    %465 = tpu.reciprocal %463 {approx = true} : vector<8x128xf32> -> vector<8x128xf32>
    %466 = arith.mulf %461, %464 : vector<8x128xf32>
    %cst_89 = arith.constant 2.000000e+00 : f32
    %467 = vector.broadcast %cst_89 : f32 to vector<8x128xf32>
    %468 = arith.subf %467, %466 : vector<8x128xf32>
    %469 = arith.mulf %464, %468 : vector<8x128xf32>
    %470 = arith.mulf %463, %465 : vector<8x128xf32>
    %cst_90 = arith.constant 2.000000e+00 : f32
    %471 = vector.broadcast %cst_90 : f32 to vector<8x128xf32>
    %472 = arith.subf %471, %470 : vector<8x128xf32>
    %473 = arith.mulf %465, %472 : vector<8x128xf32>
    %474 = arith.mulf %452, %469 : vector<8x128xf32>
    %475 = arith.mulf %452, %473 : vector<8x128xf32>
    %476 = arith.mulf %455, %469 : vector<8x128xf32>
    %477 = arith.mulf %458, %473 : vector<8x128xf32>
    %478 = arith.addf %474, %475 : vector<8x128xf32>
    %479 = arith.subf %476, %477 : vector<8x128xf32>
    %480 = arith.subf %474, %475 : vector<8x128xf32>
    %481 = arith.addf %476, %477 : vector<8x128xf32>
    %c0_91 = arith.constant 0 : index
    %482 = arith.index_cast %5 : i32 to index
    %c4_92 = arith.constant 4 : index
    %483 = vector.load %arg2[%c0_91, %482, %c4_92] : memref<4x8x6xf32, #tpu.memory_space<vmem>>, vector<1x8x1xf32>
    %484 = vector.shape_cast %483 : vector<1x8x1xf32> to vector<8x1xf32>
    %c0_93 = arith.constant 0 : index
    %485 = arith.index_cast %5 : i32 to index
    %c4_94 = arith.constant 4 : index
    %486 = vector.load %arg3[%c0_93, %485, %c4_94] : memref<4x8x6xf32, #tpu.memory_space<vmem>>, vector<1x8x1xf32>
    %487 = vector.shape_cast %486 : vector<1x8x1xf32> to vector<8x1xf32>
    %488 = vector.broadcast %484 : vector<8x1xf32> to vector<8x128xf32>
    %489 = arith.mulf %488, %478 : vector<8x128xf32>
    %490 = vector.broadcast %487 : vector<8x1xf32> to vector<8x128xf32>
    %491 = arith.mulf %490, %479 : vector<8x128xf32>
    %492 = arith.addf %489, %491 : vector<8x128xf32>
    %493 = arith.addf %385, %492 : vector<8x128xf32>
    %494 = vector.broadcast %487 : vector<8x1xf32> to vector<8x128xf32>
    %495 = arith.mulf %494, %480 : vector<8x128xf32>
    %496 = vector.broadcast %484 : vector<8x1xf32> to vector<8x128xf32>
    %497 = arith.mulf %496, %481 : vector<8x128xf32>
    %498 = arith.subf %495, %497 : vector<8x128xf32>
    %499 = arith.addf %391, %498 : vector<8x128xf32>
    %c1_95 = arith.constant 1 : index
    %500 = arith.index_cast %5 : i32 to index
    %c4_96 = arith.constant 4 : index
    %501 = vector.load %arg2[%c1_95, %500, %c4_96] : memref<4x8x6xf32, #tpu.memory_space<vmem>>, vector<1x8x1xf32>
    %502 = vector.shape_cast %501 : vector<1x8x1xf32> to vector<8x1xf32>
    %c1_97 = arith.constant 1 : index
    %503 = arith.index_cast %5 : i32 to index
    %c4_98 = arith.constant 4 : index
    %504 = vector.load %arg3[%c1_97, %503, %c4_98] : memref<4x8x6xf32, #tpu.memory_space<vmem>>, vector<1x8x1xf32>
    %505 = vector.shape_cast %504 : vector<1x8x1xf32> to vector<8x1xf32>
    %506 = vector.broadcast %502 : vector<8x1xf32> to vector<8x128xf32>
    %507 = arith.mulf %506, %478 : vector<8x128xf32>
    %508 = vector.broadcast %505 : vector<8x1xf32> to vector<8x128xf32>
    %509 = arith.mulf %508, %479 : vector<8x128xf32>
    %510 = arith.addf %507, %509 : vector<8x128xf32>
    %511 = arith.addf %403, %510 : vector<8x128xf32>
    %512 = vector.broadcast %505 : vector<8x1xf32> to vector<8x128xf32>
    %513 = arith.mulf %512, %480 : vector<8x128xf32>
    %514 = vector.broadcast %502 : vector<8x1xf32> to vector<8x128xf32>
    %515 = arith.mulf %514, %481 : vector<8x128xf32>
    %516 = arith.subf %513, %515 : vector<8x128xf32>
    %517 = arith.addf %409, %516 : vector<8x128xf32>
    %c2_99 = arith.constant 2 : index
    %518 = arith.index_cast %5 : i32 to index
    %c4_100 = arith.constant 4 : index
    %519 = vector.load %arg2[%c2_99, %518, %c4_100] : memref<4x8x6xf32, #tpu.memory_space<vmem>>, vector<1x8x1xf32>
    %520 = vector.shape_cast %519 : vector<1x8x1xf32> to vector<8x1xf32>
    %c2_101 = arith.constant 2 : index
    %521 = arith.index_cast %5 : i32 to index
    %c4_102 = arith.constant 4 : index
    %522 = vector.load %arg3[%c2_101, %521, %c4_102] : memref<4x8x6xf32, #tpu.memory_space<vmem>>, vector<1x8x1xf32>
    %523 = vector.shape_cast %522 : vector<1x8x1xf32> to vector<8x1xf32>
    %524 = vector.broadcast %520 : vector<8x1xf32> to vector<8x128xf32>
    %525 = arith.mulf %524, %478 : vector<8x128xf32>
    %526 = vector.broadcast %523 : vector<8x1xf32> to vector<8x128xf32>
    %527 = arith.mulf %526, %479 : vector<8x128xf32>
    %528 = arith.addf %525, %527 : vector<8x128xf32>
    %529 = arith.addf %421, %528 : vector<8x128xf32>
    %530 = vector.broadcast %523 : vector<8x1xf32> to vector<8x128xf32>
    %531 = arith.mulf %530, %480 : vector<8x128xf32>
    %532 = vector.broadcast %520 : vector<8x1xf32> to vector<8x128xf32>
    %533 = arith.mulf %532, %481 : vector<8x128xf32>
    %534 = arith.subf %531, %533 : vector<8x128xf32>
    %535 = arith.addf %427, %534 : vector<8x128xf32>
    %c3_103 = arith.constant 3 : index
    %536 = arith.index_cast %5 : i32 to index
    %c4_104 = arith.constant 4 : index
    %537 = vector.load %arg2[%c3_103, %536, %c4_104] : memref<4x8x6xf32, #tpu.memory_space<vmem>>, vector<1x8x1xf32>
    %538 = vector.shape_cast %537 : vector<1x8x1xf32> to vector<8x1xf32>
    %c3_105 = arith.constant 3 : index
    %539 = arith.index_cast %5 : i32 to index
    %c4_106 = arith.constant 4 : index
    %540 = vector.load %arg3[%c3_105, %539, %c4_106] : memref<4x8x6xf32, #tpu.memory_space<vmem>>, vector<1x8x1xf32>
    %541 = vector.shape_cast %540 : vector<1x8x1xf32> to vector<8x1xf32>
    %542 = vector.broadcast %538 : vector<8x1xf32> to vector<8x128xf32>
    %543 = arith.mulf %542, %478 : vector<8x128xf32>
    %544 = vector.broadcast %541 : vector<8x1xf32> to vector<8x128xf32>
    %545 = arith.mulf %544, %479 : vector<8x128xf32>
    %546 = arith.addf %543, %545 : vector<8x128xf32>
    %547 = arith.addf %439, %546 : vector<8x128xf32>
    %548 = vector.broadcast %541 : vector<8x1xf32> to vector<8x128xf32>
    %549 = arith.mulf %548, %480 : vector<8x128xf32>
    %550 = vector.broadcast %538 : vector<8x1xf32> to vector<8x128xf32>
    %551 = arith.mulf %550, %481 : vector<8x128xf32>
    %552 = arith.subf %549, %551 : vector<8x128xf32>
    %553 = arith.addf %445, %552 : vector<8x128xf32>
    %554 = arith.index_cast %5 : i32 to index
    %c5 = arith.constant 5 : index
    %555 = vector.load %arg4[%554, %c5] : memref<8x6xf32, #tpu.memory_space<vmem>>, vector<8x1xf32>
    %556 = arith.index_cast %5 : i32 to index
    %c5_107 = arith.constant 5 : index
    %557 = vector.load %arg5[%556, %c5_107] : memref<8x6xf32, #tpu.memory_space<vmem>>, vector<8x1xf32>
    %558 = vector.broadcast %0 : vector<1x128xf32> to vector<8x128xf32>
    %559 = vector.broadcast %555 : vector<8x1xf32> to vector<8x128xf32>
    %560 = arith.subf %558, %559 : vector<8x128xf32>
    %561 = vector.broadcast %1 : vector<1x128xf32> to vector<8x128xf32>
    %562 = vector.broadcast %557 : vector<8x1xf32> to vector<8x128xf32>
    %563 = arith.subf %561, %562 : vector<8x128xf32>
    %564 = vector.broadcast %1 : vector<1x128xf32> to vector<8x128xf32>
    %565 = vector.broadcast %557 : vector<8x1xf32> to vector<8x128xf32>
    %566 = arith.addf %564, %565 : vector<8x128xf32>
    %567 = arith.mulf %560, %560 : vector<8x128xf32>
    %568 = arith.mulf %563, %563 : vector<8x128xf32>
    %569 = arith.addf %567, %568 : vector<8x128xf32>
    %570 = arith.mulf %566, %566 : vector<8x128xf32>
    %571 = arith.addf %567, %570 : vector<8x128xf32>
    %572 = tpu.reciprocal %569 {approx = true} : vector<8x128xf32> -> vector<8x128xf32>
    %573 = tpu.reciprocal %571 {approx = true} : vector<8x128xf32> -> vector<8x128xf32>
    %574 = arith.mulf %569, %572 : vector<8x128xf32>
    %cst_108 = arith.constant 2.000000e+00 : f32
    %575 = vector.broadcast %cst_108 : f32 to vector<8x128xf32>
    %576 = arith.subf %575, %574 : vector<8x128xf32>
    %577 = arith.mulf %572, %576 : vector<8x128xf32>
    %578 = arith.mulf %571, %573 : vector<8x128xf32>
    %cst_109 = arith.constant 2.000000e+00 : f32
    %579 = vector.broadcast %cst_109 : f32 to vector<8x128xf32>
    %580 = arith.subf %579, %578 : vector<8x128xf32>
    %581 = arith.mulf %573, %580 : vector<8x128xf32>
    %582 = arith.mulf %560, %577 : vector<8x128xf32>
    %583 = arith.mulf %560, %581 : vector<8x128xf32>
    %584 = arith.mulf %563, %577 : vector<8x128xf32>
    %585 = arith.mulf %566, %581 : vector<8x128xf32>
    %586 = arith.addf %582, %583 : vector<8x128xf32>
    %587 = arith.subf %584, %585 : vector<8x128xf32>
    %588 = arith.subf %582, %583 : vector<8x128xf32>
    %589 = arith.addf %584, %585 : vector<8x128xf32>
    %c0_110 = arith.constant 0 : index
    %590 = arith.index_cast %5 : i32 to index
    %c5_111 = arith.constant 5 : index
    %591 = vector.load %arg2[%c0_110, %590, %c5_111] : memref<4x8x6xf32, #tpu.memory_space<vmem>>, vector<1x8x1xf32>
    %592 = vector.shape_cast %591 : vector<1x8x1xf32> to vector<8x1xf32>
    %c0_112 = arith.constant 0 : index
    %593 = arith.index_cast %5 : i32 to index
    %c5_113 = arith.constant 5 : index
    %594 = vector.load %arg3[%c0_112, %593, %c5_113] : memref<4x8x6xf32, #tpu.memory_space<vmem>>, vector<1x8x1xf32>
    %595 = vector.shape_cast %594 : vector<1x8x1xf32> to vector<8x1xf32>
    %596 = vector.broadcast %592 : vector<8x1xf32> to vector<8x128xf32>
    %597 = arith.mulf %596, %586 : vector<8x128xf32>
    %598 = vector.broadcast %595 : vector<8x1xf32> to vector<8x128xf32>
    %599 = arith.mulf %598, %587 : vector<8x128xf32>
    %600 = arith.addf %597, %599 : vector<8x128xf32>
    %601 = arith.addf %493, %600 : vector<8x128xf32>
    %602 = vector.broadcast %595 : vector<8x1xf32> to vector<8x128xf32>
    %603 = arith.mulf %602, %588 : vector<8x128xf32>
    %604 = vector.broadcast %592 : vector<8x1xf32> to vector<8x128xf32>
    %605 = arith.mulf %604, %589 : vector<8x128xf32>
    %606 = arith.subf %603, %605 : vector<8x128xf32>
    %607 = arith.addf %499, %606 : vector<8x128xf32>
    %c1_114 = arith.constant 1 : index
    %608 = arith.index_cast %5 : i32 to index
    %c5_115 = arith.constant 5 : index
    %609 = vector.load %arg2[%c1_114, %608, %c5_115] : memref<4x8x6xf32, #tpu.memory_space<vmem>>, vector<1x8x1xf32>
    %610 = vector.shape_cast %609 : vector<1x8x1xf32> to vector<8x1xf32>
    %c1_116 = arith.constant 1 : index
    %611 = arith.index_cast %5 : i32 to index
    %c5_117 = arith.constant 5 : index
    %612 = vector.load %arg3[%c1_116, %611, %c5_117] : memref<4x8x6xf32, #tpu.memory_space<vmem>>, vector<1x8x1xf32>
    %613 = vector.shape_cast %612 : vector<1x8x1xf32> to vector<8x1xf32>
    %614 = vector.broadcast %610 : vector<8x1xf32> to vector<8x128xf32>
    %615 = arith.mulf %614, %586 : vector<8x128xf32>
    %616 = vector.broadcast %613 : vector<8x1xf32> to vector<8x128xf32>
    %617 = arith.mulf %616, %587 : vector<8x128xf32>
    %618 = arith.addf %615, %617 : vector<8x128xf32>
    %619 = arith.addf %511, %618 : vector<8x128xf32>
    %620 = vector.broadcast %613 : vector<8x1xf32> to vector<8x128xf32>
    %621 = arith.mulf %620, %588 : vector<8x128xf32>
    %622 = vector.broadcast %610 : vector<8x1xf32> to vector<8x128xf32>
    %623 = arith.mulf %622, %589 : vector<8x128xf32>
    %624 = arith.subf %621, %623 : vector<8x128xf32>
    %625 = arith.addf %517, %624 : vector<8x128xf32>
    %c2_118 = arith.constant 2 : index
    %626 = arith.index_cast %5 : i32 to index
    %c5_119 = arith.constant 5 : index
    %627 = vector.load %arg2[%c2_118, %626, %c5_119] : memref<4x8x6xf32, #tpu.memory_space<vmem>>, vector<1x8x1xf32>
    %628 = vector.shape_cast %627 : vector<1x8x1xf32> to vector<8x1xf32>
    %c2_120 = arith.constant 2 : index
    %629 = arith.index_cast %5 : i32 to index
    %c5_121 = arith.constant 5 : index
    %630 = vector.load %arg3[%c2_120, %629, %c5_121] : memref<4x8x6xf32, #tpu.memory_space<vmem>>, vector<1x8x1xf32>
    %631 = vector.shape_cast %630 : vector<1x8x1xf32> to vector<8x1xf32>
    %632 = vector.broadcast %628 : vector<8x1xf32> to vector<8x128xf32>
    %633 = arith.mulf %632, %586 : vector<8x128xf32>
    %634 = vector.broadcast %631 : vector<8x1xf32> to vector<8x128xf32>
    %635 = arith.mulf %634, %587 : vector<8x128xf32>
    %636 = arith.addf %633, %635 : vector<8x128xf32>
    %637 = arith.addf %529, %636 : vector<8x128xf32>
    %638 = vector.broadcast %631 : vector<8x1xf32> to vector<8x128xf32>
    %639 = arith.mulf %638, %588 : vector<8x128xf32>
    %640 = vector.broadcast %628 : vector<8x1xf32> to vector<8x128xf32>
    %641 = arith.mulf %640, %589 : vector<8x128xf32>
    %642 = arith.subf %639, %641 : vector<8x128xf32>
    %643 = arith.addf %535, %642 : vector<8x128xf32>
    %c3_122 = arith.constant 3 : index
    %644 = arith.index_cast %5 : i32 to index
    %c5_123 = arith.constant 5 : index
    %645 = vector.load %arg2[%c3_122, %644, %c5_123] : memref<4x8x6xf32, #tpu.memory_space<vmem>>, vector<1x8x1xf32>
    %646 = vector.shape_cast %645 : vector<1x8x1xf32> to vector<8x1xf32>
    %c3_124 = arith.constant 3 : index
    %647 = arith.index_cast %5 : i32 to index
    %c5_125 = arith.constant 5 : index
    %648 = vector.load %arg3[%c3_124, %647, %c5_125] : memref<4x8x6xf32, #tpu.memory_space<vmem>>, vector<1x8x1xf32>
    %649 = vector.shape_cast %648 : vector<1x8x1xf32> to vector<8x1xf32>
    %650 = vector.broadcast %646 : vector<8x1xf32> to vector<8x128xf32>
    %651 = arith.mulf %650, %586 : vector<8x128xf32>
    %652 = vector.broadcast %649 : vector<8x1xf32> to vector<8x128xf32>
    %653 = arith.mulf %652, %587 : vector<8x128xf32>
    %654 = arith.addf %651, %653 : vector<8x128xf32>
    %655 = arith.addf %547, %654 : vector<8x128xf32>
    %656 = vector.broadcast %649 : vector<8x1xf32> to vector<8x128xf32>
    %657 = arith.mulf %656, %588 : vector<8x128xf32>
    %658 = vector.broadcast %646 : vector<8x1xf32> to vector<8x128xf32>
    %659 = arith.mulf %658, %589 : vector<8x128xf32>
    %660 = arith.subf %657, %659 : vector<8x128xf32>
    %661 = arith.addf %553, %660 : vector<8x128xf32>
    %c0_126 = arith.constant 0 : index
    %662 = arith.index_cast %5 : i32 to index
    %c0_127 = arith.constant 0 : index
    %663 = vector.load %arg8[%c0_126, %662, %c0_127] : memref<4x8x128xf32, #tpu.memory_space<vmem>>, vector<1x8x128xf32>
    %664 = vector.shape_cast %663 : vector<1x8x128xf32> to vector<8x128xf32>
    %665 = vector.shape_cast %601 : vector<8x128xf32> to vector<1x8x128xf32>
    tpu.vector_store %arg8[%c0_126, %662, %c0_127], %665 {strides = array<i32>} : memref<4x8x128xf32, #tpu.memory_space<vmem>>, vector<1x8x128xf32>,
    %c0_128 = arith.constant 0 : index
    %666 = arith.index_cast %5 : i32 to index
    %c0_129 = arith.constant 0 : index
    %667 = vector.load %arg9[%c0_128, %666, %c0_129] : memref<4x8x128xf32, #tpu.memory_space<vmem>>, vector<1x8x128xf32>
    %668 = vector.shape_cast %667 : vector<1x8x128xf32> to vector<8x128xf32>
    %669 = vector.shape_cast %607 : vector<8x128xf32> to vector<1x8x128xf32>
    tpu.vector_store %arg9[%c0_128, %666, %c0_129], %669 {strides = array<i32>} : memref<4x8x128xf32, #tpu.memory_space<vmem>>, vector<1x8x128xf32>,
    %c1_130 = arith.constant 1 : index
    %670 = arith.index_cast %5 : i32 to index
    %c0_131 = arith.constant 0 : index
    %671 = vector.load %arg8[%c1_130, %670, %c0_131] : memref<4x8x128xf32, #tpu.memory_space<vmem>>, vector<1x8x128xf32>
    %672 = vector.shape_cast %671 : vector<1x8x128xf32> to vector<8x128xf32>
    %673 = vector.shape_cast %619 : vector<8x128xf32> to vector<1x8x128xf32>
    tpu.vector_store %arg8[%c1_130, %670, %c0_131], %673 {strides = array<i32>} : memref<4x8x128xf32, #tpu.memory_space<vmem>>, vector<1x8x128xf32>,
    %c1_132 = arith.constant 1 : index
    %674 = arith.index_cast %5 : i32 to index
    %c0_133 = arith.constant 0 : index
    %675 = vector.load %arg9[%c1_132, %674, %c0_133] : memref<4x8x128xf32, #tpu.memory_space<vmem>>, vector<1x8x128xf32>
    %676 = vector.shape_cast %675 : vector<1x8x128xf32> to vector<8x128xf32>
    %677 = vector.shape_cast %625 : vector<8x128xf32> to vector<1x8x128xf32>
    tpu.vector_store %arg9[%c1_132, %674, %c0_133], %677 {strides = array<i32>} : memref<4x8x128xf32, #tpu.memory_space<vmem>>, vector<1x8x128xf32>,
    %c2_134 = arith.constant 2 : index
    %678 = arith.index_cast %5 : i32 to index
    %c0_135 = arith.constant 0 : index
    %679 = vector.load %arg8[%c2_134, %678, %c0_135] : memref<4x8x128xf32, #tpu.memory_space<vmem>>, vector<1x8x128xf32>
    %680 = vector.shape_cast %679 : vector<1x8x128xf32> to vector<8x128xf32>
    %681 = vector.shape_cast %637 : vector<8x128xf32> to vector<1x8x128xf32>
    tpu.vector_store %arg8[%c2_134, %678, %c0_135], %681 {strides = array<i32>} : memref<4x8x128xf32, #tpu.memory_space<vmem>>, vector<1x8x128xf32>,
    %c2_136 = arith.constant 2 : index
    %682 = arith.index_cast %5 : i32 to index
    %c0_137 = arith.constant 0 : index
    %683 = vector.load %arg9[%c2_136, %682, %c0_137] : memref<4x8x128xf32, #tpu.memory_space<vmem>>, vector<1x8x128xf32>
    %684 = vector.shape_cast %683 : vector<1x8x128xf32> to vector<8x128xf32>
    %685 = vector.shape_cast %643 : vector<8x128xf32> to vector<1x8x128xf32>
    tpu.vector_store %arg9[%c2_136, %682, %c0_137], %685 {strides = array<i32>} : memref<4x8x128xf32, #tpu.memory_space<vmem>>, vector<1x8x128xf32>,
    %c3_138 = arith.constant 3 : index
    %686 = arith.index_cast %5 : i32 to index
    %c0_139 = arith.constant 0 : index
    %687 = vector.load %arg8[%c3_138, %686, %c0_139] : memref<4x8x128xf32, #tpu.memory_space<vmem>>, vector<1x8x128xf32>
    %688 = vector.shape_cast %687 : vector<1x8x128xf32> to vector<8x128xf32>
    %689 = vector.shape_cast %655 : vector<8x128xf32> to vector<1x8x128xf32>
    tpu.vector_store %arg8[%c3_138, %686, %c0_139], %689 {strides = array<i32>} : memref<4x8x128xf32, #tpu.memory_space<vmem>>, vector<1x8x128xf32>,
    %c3_140 = arith.constant 3 : index
    %690 = arith.index_cast %5 : i32 to index
    %c0_141 = arith.constant 0 : index
    %691 = vector.load %arg9[%c3_140, %690, %c0_141] : memref<4x8x128xf32, #tpu.memory_space<vmem>>, vector<1x8x128xf32>
    %692 = vector.shape_cast %691 : vector<1x8x128xf32> to vector<8x128xf32>
    %693 = vector.shape_cast %661 : vector<8x128xf32> to vector<1x8x128xf32>
    tpu.vector_store %arg9[%c3_140, %690, %c0_141], %693 {strides = array<i32>} : memref<4x8x128xf32, #tpu.memory_space<vmem>>, vector<1x8x128xf32>,
    %c1_i32_142 = arith.constant 1 : i32
    return
  }
  func.func @transform_0(%arg0: i32, %arg1: i32) -> (i32, i32, i32) {
    %c0_i32 = arith.constant 0 : i32
    %c0_i32_0 = arith.constant 0 : i32
    %c0_i32_1 = arith.constant 0 : i32
    return %c0_i32, %arg0, %c0_i32_0 : i32, i32, i32
  }
  func.func @transform_1(%arg0: i32, %arg1: i32) -> (i32, i32, i32) {
    %c0_i32 = arith.constant 0 : i32
    %c0_i32_0 = arith.constant 0 : i32
    %c0_i32_1 = arith.constant 0 : i32
    return %c0_i32, %arg0, %c0_i32_0 : i32, i32, i32
  }
  func.func @transform_2(%arg0: i32, %arg1: i32) -> (i32, i32) {
    %c0_i32 = arith.constant 0 : i32
    %c0_i32_0 = arith.constant 0 : i32
    return %arg0, %c0_i32 : i32, i32
  }
  func.func @transform_3(%arg0: i32, %arg1: i32) -> (i32, i32) {
    %c0_i32 = arith.constant 0 : i32
    %c0_i32_0 = arith.constant 0 : i32
    return %arg0, %c0_i32 : i32, i32
  }
  func.func @transform_4(%arg0: i32, %arg1: i32) -> (i32, i32) {
    %c0_i32 = arith.constant 0 : i32
    %c0_i32_0 = arith.constant 0 : i32
    return %c0_i32, %arg1 : i32, i32
  }
  func.func @transform_5(%arg0: i32, %arg1: i32) -> (i32, i32) {
    %c0_i32 = arith.constant 0 : i32
    %c0_i32_0 = arith.constant 0 : i32
    return %c0_i32, %arg1 : i32, i32
  }
  func.func @transform_6(%arg0: i32, %arg1: i32) -> (i32, i32, i32) {
    %c0_i32 = arith.constant 0 : i32
    %c0_i32_0 = arith.constant 0 : i32
    return %c0_i32, %arg0, %arg1 : i32, i32, i32
  }
  func.func @transform_7(%arg0: i32, %arg1: i32) -> (i32, i32, i32) {
    %c0_i32 = arith.constant 0 : i32
    %c0_i32_0 = arith.constant 0 : i32
    return %c0_i32, %arg0, %arg1 : i32, i32, i32
  }
}

</mosaic_0001>

<llo_original>
// kernel: tpu_custom_call.1
$region0: #{tpu_custom_call.1}
  #allocation0 [shape = 'u32[]', space=smem, size = 0x4, offset = 0x4, fixed_abs, tag = 'smem constant byte address 0x4 - core index']
  #allocation1 [shape = 'u32[72,128]{1,0:T(1,128)}', space=vmem, size = 0x9000, scoped, tag = 'internal scratch']
  %s0 = inlined_call_operand.vmem [shape: f32[4,8,6], index: 0, kind: input, shape index: {}]
  %s1 = inlined_call_operand.vmem [shape: f32[4,8,6], index: 1, kind: input, shape index: {}]
  %s2 = inlined_call_operand.vmem [shape: f32[8,6], index: 2, kind: input, shape index: {}]
  %s3 = inlined_call_operand.vmem [shape: f32[8,6], index: 3, kind: input, shape index: {}]
  %s4 = inlined_call_operand.vmem [shape: f32[1,128], index: 4, kind: input, shape index: {}]
  %s5 = inlined_call_operand.vmem [shape: f32[1,128], index: 5, kind: input, shape index: {}]
  %s6 = inlined_call_operand.hbm [shape: f32[4,8,128], index: 6, kind: output, shape index: {0}]
  %s7 = inlined_call_operand.hbm [shape: f32[4,8,128], index: 7, kind: output, shape index: {1}]
  %8 = xla_tuple %s6, %s7
  %s9 = sld [smem:[#allocation0]]
  $region42: #{tpu_custom_call.1} parent=0
    _
  %s11 = ssub.s32 1, %s9
  %s12 = scalar_select 0, %s11, %s9
  $region1: #{tpu_custom_call.1} parent=0
    #allocation2 [shape = 'u8[16384]{0}', space=vmem, size = 0x4000, scoped, tag = 'output window, operand 0, single buffered']
    #allocation3 [shape = 's32[1]{0}', space=sflag, size = 0x4, scoped, tag = 'scoped memory for tpu_custom_call.1']
    #allocation4 [shape = 'u8[16384]{0}', space=vmem, size = 0x4000, scoped, tag = 'output window, operand 1, single buffered']
    #allocation5 [shape = 's32[1]{0}', space=sflag, size = 0x4, scoped, tag = 'scoped memory for tpu_custom_call.1']
    %13 = vsyncpa [#allocation3], 0
    %14 = vsyncpa [#allocation5], 0
    // Predicated region
    $region2: #{tpu_custom_call.1} parent=1 // pred_check
      _
    $region3: #{tpu_custom_call.1} parent=1 // pred_check_branch
      %16 = sbr.rel (0) target = $region5
    $region4: #{tpu_custom_call.1} parent=1 // pred_region
      _
    $region5: #{tpu_custom_call.1} parent=1 // pred_fallthru
      _
    // Predicated region
    $region6: #{tpu_custom_call.1} parent=1 // pred_check
      _
    $region7: #{tpu_custom_call.1} parent=1 // pred_check_branch
      %18 = sbr.rel (0) target = $region9
    $region8: #{tpu_custom_call.1} parent=1 // pred_region
      _
    $region9: #{tpu_custom_call.1} parent=1 // pred_fallthru
      _
    // Predicated region
    $region10: #{tpu_custom_call.1} parent=1 // pred_check
      _
    $region11: #{tpu_custom_call.1} parent=1 // pred_check_branch
      %20 = sbr.rel (0) target = $region13
    $region12: #{tpu_custom_call.1} parent=1 // pred_region
      _
    $region13: #{tpu_custom_call.1} parent=1 // pred_fallthru
      _
    // Predicated region
    $region14: #{tpu_custom_call.1} parent=1 // pred_check
      _
    $region15: #{tpu_custom_call.1} parent=1 // pred_check_branch
      %22 = sbr.rel (0) target = $region17
    $region16: #{tpu_custom_call.1} parent=1 // pred_region
      _
    $region17: #{tpu_custom_call.1} parent=1 // pred_fallthru
      _
    // Predicated region
    $region18: #{tpu_custom_call.1} parent=1 // pred_check
      _
    $region19: #{tpu_custom_call.1} parent=1 // pred_check_branch
      %24 = sbr.rel (0) target = $region21
    $region20: #{tpu_custom_call.1} parent=1 // pred_region
      _
    $region21: #{tpu_custom_call.1} parent=1 // pred_fallthru
      _
    // Predicated region
    $region22: #{tpu_custom_call.1} parent=1 // pred_check
      _
    $region23: #{tpu_custom_call.1} parent=1 // pred_check_branch
      %26 = sbr.rel (0) target = $region25
    $region24: #{tpu_custom_call.1} parent=1 // pred_region
      _
    $region25: #{tpu_custom_call.1} parent=1 // pred_fallthru
      _
    %v27 = vld [vmem:[%s4] sm:$0x1]
    %v28 = vld [vmem:[%s5] sm:$0x1]
    %v29 = vld [vmem:[%s2] sm:$0xff]
    %v30 = vld [vmem:[%s3] sm:$0xff]
    %v32 = vperm.slane %v27, 0
    %35 = vset.pattern.permute.xlu0 0
    %36 = vperm.xlu0 %35, %v29
    %v37 = vpop.permute.xlu0 %36
    %v39 = vsub.f32 %v32, %v37
    %v41 = vperm.slane %v28, 0
    %44 = vset.pattern.permute.xlu0 0
    %45 = vperm.xlu0 %44, %v30
    %v46 = vpop.permute.xlu0 %45
    %v48 = vsub.f32 %v41, %v46
    %v49 = vadd.f32 %v41, %v46
    %v50 = vmul.f32 %v39, %v39
    %v51 = vmul.f32 %v48, %v48
    %v52 = vadd.f32 %v50, %v51
    %v53 = vmul.f32 %v49, %v49
    %v54 = vadd.f32 %v50, %v53
    %v55 = vrcp.pop %v52
    %v56 = vrcp.pop %v54
    %v57 = vmul.f32 %v52, %v55
    %v58 = vsub.f32 2.0, %v57
    %v59 = vmul.f32 %v55, %v58
    %v60 = vmul.f32 %v54, %v56
    %v61 = vsub.f32 2.0, %v60
    %v62 = vmul.f32 %v56, %v61
    %v63 = vmul.f32 %v39, %v59
    %v64 = vmul.f32 %v39, %v62
    %v65 = vmul.f32 %v48, %v59
    %v66 = vmul.f32 %v49, %v62
    %v67 = vadd.f32 %v63, %v64
    %v68 = vsub.f32 %v65, %v66
    %v69 = vsub.f32 %v63, %v64
    %v70 = vadd.f32 %v65, %v66
    %v71 = vld [vmem:[%s0] sm:$0xff]
    %v72 = vld [vmem:[%s1] sm:$0xff]
    %74 = vset.pattern.permute.xlu0 0
    %75 = vperm.xlu0 %74, %v71
    %v76 = vpop.permute.xlu0 %75
    %v78 = vmul.f32 %v76, %v67
    %80 = vset.pattern.permute.xlu0 0
    %81 = vperm.xlu0 %80, %v72
    %v82 = vpop.permute.xlu0 %81
    %v84 = vmul.f32 %v82, %v68
    %v85 = vadd.f32 %v78, %v84
    %v86 = vadd.f32 %v85, 0.0
    %v87 = vmul.f32 %v82, %v69
    %v88 = vmul.f32 %v76, %v70
    %v89 = vsub.f32 %v87, %v88
    %v90 = vadd.f32 %v89, 0.0
    %s91 = sadd.s32 0, 8
    %s92 = scalar_lea.vmem %s0, %s91
    %v93 = vld [vmem:[%s92] sm:$0xff]
    %s94 = scalar_lea.vmem %s1, %s91
    %v95 = vld [vmem:[%s94] sm:$0xff]
    %97 = vset.pattern.permute.xlu0 0
    %98 = vperm.xlu0 %97, %v93
    %v99 = vpop.permute.xlu0 %98
    %v101 = vmul.f32 %v99, %v67
    %103 = vset.pattern.permute.xlu0 0
    %104 = vperm.xlu0 %103, %v95
    %v105 = vpop.permute.xlu0 %104
    %v107 = vmul.f32 %v105, %v68
    %v108 = vadd.f32 %v101, %v107
    %v109 = vadd.f32 %v108, 0.0
    %v110 = vmul.f32 %v105, %v69
    %v111 = vmul.f32 %v99, %v70
    %v112 = vsub.f32 %v110, %v111
    %v113 = vadd.f32 %v112, 0.0
    %s114 = sadd.s32 0, 16
    %s115 = scalar_lea.vmem %s0, %s114
    %v116 = vld [vmem:[%s115] sm:$0xff]
    %s117 = scalar_lea.vmem %s1, %s114
    %v118 = vld [vmem:[%s117] sm:$0xff]
    %120 = vset.pattern.permute.xlu0 0
    %121 = vperm.xlu0 %120, %v116
    %v122 = vpop.permute.xlu0 %121
    %v124 = vmul.f32 %v122, %v67
    %126 = vset.pattern.permute.xlu0 0
    %127 = vperm.xlu0 %126, %v118
    %v128 = vpop.permute.xlu0 %127
    %v130 = vmul.f32 %v128, %v68
    %v131 = vadd.f32 %v124, %v130
    %v132 = vadd.f32 %v131, 0.0
    %v133 = vmul.f32 %v128, %v69
    %v134 = vmul.f32 %v122, %v70
    %v135 = vsub.f32 %v133, %v134
    %v136 = vadd.f32 %v135, 0.0
    %s137 = sadd.s32 0, 24
    %s138 = scalar_lea.vmem %s0, %s137
    %v139 = vld [vmem:[%s138] sm:$0xff]
    %s140 = scalar_lea.vmem %s1, %s137
    %v141 = vld [vmem:[%s140] sm:$0xff]
    %143 = vset.pattern.permute.xlu0 0
    %144 = vperm.xlu0 %143, %v139
    %v145 = vpop.permute.xlu0 %144
    %v147 = vmul.f32 %v145, %v67
    %149 = vset.pattern.permute.xlu0 0
    %150 = vperm.xlu0 %149, %v141
    %v151 = vpop.permute.xlu0 %150
    %v153 = vmul.f32 %v151, %v68
    %v154 = vadd.f32 %v147, %v153
    %v155 = vadd.f32 %v154, 0.0
    %v156 = vmul.f32 %v151, %v69
    %v157 = vmul.f32 %v145, %v70
    %v158 = vsub.f32 %v156, %v157
    %v159 = vadd.f32 %v158, 0.0
    %160 = vset.pattern.permute.xlu0 1
    %161 = vperm.xlu0 %160, %v29
    %v162 = vpop.permute.xlu0 %161
    %v164 = vsub.f32 %v32, %v162
    %165 = vset.pattern.permute.xlu0 1
    %166 = vperm.xlu0 %165, %v30
    %v167 = vpop.permute.xlu0 %166
    %v169 = vsub.f32 %v41, %v167
    %v170 = vadd.f32 %v41, %v167
    %v171 = vmul.f32 %v164, %v164
    %v172 = vmul.f32 %v169, %v169
    %v173 = vadd.f32 %v171, %v172
    %v174 = vmul.f32 %v170, %v170
    %v175 = vadd.f32 %v171, %v174
    %v176 = vrcp.pop %v173
    %v177 = vrcp.pop %v175
    %v178 = vmul.f32 %v173, %v176
    %v179 = vsub.f32 2.0, %v178
    %v180 = vmul.f32 %v176, %v179
    %v181 = vmul.f32 %v175, %v177
    %v182 = vsub.f32 2.0, %v181
    %v183 = vmul.f32 %v177, %v182
    %v184 = vmul.f32 %v164, %v180
    %v185 = vmul.f32 %v164, %v183
    %v186 = vmul.f32 %v169, %v180
    %v187 = vmul.f32 %v170, %v183
    %v188 = vadd.f32 %v184, %v185
    %v189 = vsub.f32 %v186, %v187
    %v190 = vsub.f32 %v184, %v185
    %v191 = vadd.f32 %v186, %v187
    %192 = vset.pattern.permute.xlu0 1
    %193 = vperm.xlu0 %192, %v71
    %v194 = vpop.permute.xlu0 %193
    %v196 = vmul.f32 %v194, %v188
    %197 = vset.pattern.permute.xlu0 1
    %198 = vperm.xlu0 %197, %v72
    %v199 = vpop.permute.xlu0 %198
    %v201 = vmul.f32 %v199, %v189
    %v202 = vadd.f32 %v196, %v201
    %v203 = vadd.f32 %v86, %v202
    %v204 = vmul.f32 %v199, %v190
    %v205 = vmul.f32 %v194, %v191
    %v206 = vsub.f32 %v204, %v205
    %v207 = vadd.f32 %v90, %v206
    %208 = vset.pattern.permute.xlu0 1
    %209 = vperm.xlu0 %208, %v93
    %v210 = vpop.permute.xlu0 %209
    %v212 = vmul.f32 %v210, %v188
    %213 = vset.pattern.permute.xlu0 1
    %214 = vperm.xlu0 %213, %v95
    %v215 = vpop.permute.xlu0 %214
    %v217 = vmul.f32 %v215, %v189
    %v218 = vadd.f32 %v212, %v217
    %v219 = vadd.f32 %v109, %v218
    %v220 = vmul.f32 %v215, %v190
    %v221 = vmul.f32 %v210, %v191
    %v222 = vsub.f32 %v220, %v221
    %v223 = vadd.f32 %v113, %v222
    %224 = vset.pattern.permute.xlu0 1
    %225 = vperm.xlu0 %224, %v116
    %v226 = vpop.permute.xlu0 %225
    %v228 = vmul.f32 %v226, %v188
    %229 = vset.pattern.permute.xlu0 1
    %230 = vperm.xlu0 %229, %v118
    %v231 = vpop.permute.xlu0 %230
    %v233 = vmul.f32 %v231, %v189
    %v234 = vadd.f32 %v228, %v233
    %v235 = vadd.f32 %v132, %v234
    %v236 = vmul.f32 %v231, %v190
    %v237 = vmul.f32 %v226, %v191
    %v238 = vsub.f32 %v236, %v237
    %v239 = vadd.f32 %v136, %v238
    %240 = vset.pattern.permute.xlu0 1
    %241 = vperm.xlu0 %240, %v139
    %v242 = vpop.permute.xlu0 %241
    %v244 = vmul.f32 %v242, %v188
    %245 = vset.pattern.permute.xlu0 1
    %246 = vperm.xlu0 %245, %v141
    %v247 = vpop.permute.xlu0 %246
    %v249 = vmul.f32 %v247, %v189
    %v250 = vadd.f32 %v244, %v249
    %v251 = vadd.f32 %v155, %v250
    %v252 = vmul.f32 %v247, %v190
    %v253 = vmul.f32 %v242, %v191
    %v254 = vsub.f32 %v252, %v253
    %v255 = vadd.f32 %v159, %v254
    %256 = vset.pattern.permute.xlu0 2
    %257 = vperm.xlu0 %256, %v29
    %v258 = vpop.permute.xlu0 %257
    %v260 = vsub.f32 %v32, %v258
    %261 = vset.pattern.permute.xlu0 2
    %262 = vperm.xlu0 %261, %v30
    %v263 = vpop.permute.xlu0 %262
    %v265 = vsub.f32 %v41, %v263
    %v266 = vadd.f32 %v41, %v263
    %v267 = vmul.f32 %v260, %v260
    %v268 = vmul.f32 %v265, %v265
    %v269 = vadd.f32 %v267, %v268
    %v270 = vmul.f32 %v266, %v266
    %v271 = vadd.f32 %v267, %v270
    %v272 = vrcp.pop %v269
    %v273 = vrcp.pop %v271
    %v274 = vmul.f32 %v269, %v272
    %v275 = vsub.f32 2.0, %v274
    %v276 = vmul.f32 %v272, %v275
    %v277 = vmul.f32 %v271, %v273
    %v278 = vsub.f32 2.0, %v277
    %v279 = vmul.f32 %v273, %v278
    %v280 = vmul.f32 %v260, %v276
    %v281 = vmul.f32 %v260, %v279
    %v282 = vmul.f32 %v265, %v276
    %v283 = vmul.f32 %v266, %v279
    %v284 = vadd.f32 %v280, %v281
    %v285 = vsub.f32 %v282, %v283
    %v286 = vsub.f32 %v280, %v281
    %v287 = vadd.f32 %v282, %v283
    %288 = vset.pattern.permute.xlu0 2
    %289 = vperm.xlu0 %288, %v71
    %v290 = vpop.permute.xlu0 %289
    %v292 = vmul.f32 %v290, %v284
    %293 = vset.pattern.permute.xlu0 2
    %294 = vperm.xlu0 %293, %v72
    %v295 = vpop.permute.xlu0 %294
    %v297 = vmul.f32 %v295, %v285
    %v298 = vadd.f32 %v292, %v297
    %v299 = vadd.f32 %v203, %v298
    %v300 = vmul.f32 %v295, %v286
    %v301 = vmul.f32 %v290, %v287
    %v302 = vsub.f32 %v300, %v301
    %v303 = vadd.f32 %v207, %v302
    %304 = vset.pattern.permute.xlu0 2
    %305 = vperm.xlu0 %304, %v93
    %v306 = vpop.permute.xlu0 %305
    %v308 = vmul.f32 %v306, %v284
    %309 = vset.pattern.permute.xlu0 2
    %310 = vperm.xlu0 %309, %v95
    %v311 = vpop.permute.xlu0 %310
    %v313 = vmul.f32 %v311, %v285
    %v314 = vadd.f32 %v308, %v313
    %v315 = vadd.f32 %v219, %v314
    %v316 = vmul.f32 %v311, %v286
    %v317 = vmul.f32 %v306, %v287
    %v318 = vsub.f32 %v316, %v317
    %v319 = vadd.f32 %v223, %v318
    %320 = vset.pattern.permute.xlu0 2
    %321 = vperm.xlu0 %320, %v116
    %v322 = vpop.permute.xlu0 %321
    %v324 = vmul.f32 %v322, %v284
    %325 = vset.pattern.permute.xlu0 2
    %326 = vperm.xlu0 %325, %v118
    %v327 = vpop.permute.xlu0 %326
    %v329 = vmul.f32 %v327, %v285
    %v330 = vadd.f32 %v324, %v329
    %v331 = vadd.f32 %v235, %v330
    %v332 = vmul.f32 %v327, %v286
    %v333 = vmul.f32 %v322, %v287
    %v334 = vsub.f32 %v332, %v333
    %v335 = vadd.f32 %v239, %v334
    %336 = vset.pattern.permute.xlu0 2
    %337 = vperm.xlu0 %336, %v139
    %v338 = vpop.permute.xlu0 %337
    %v340 = vmul.f32 %v338, %v284
    %341 = vset.pattern.permute.xlu0 2
    %342 = vperm.xlu0 %341, %v141
    %v343 = vpop.permute.xlu0 %342
    %v345 = vmul.f32 %v343, %v285
    %v346 = vadd.f32 %v340, %v345
    %v347 = vadd.f32 %v251, %v346
    %v348 = vmul.f32 %v343, %v286
    %v349 = vmul.f32 %v338, %v287
    %v350 = vsub.f32 %v348, %v349
    %v351 = vadd.f32 %v255, %v350
    %352 = vset.pattern.permute.xlu0 3
    %353 = vperm.xlu0 %352, %v29
    %v354 = vpop.permute.xlu0 %353
    %v356 = vsub.f32 %v32, %v354
    %357 = vset.pattern.permute.xlu0 3
    %358 = vperm.xlu0 %357, %v30
    %v359 = vpop.permute.xlu0 %358
    %v361 = vsub.f32 %v41, %v359
    %v362 = vadd.f32 %v41, %v359
    %v363 = vmul.f32 %v356, %v356
    %v364 = vmul.f32 %v361, %v361
    %v365 = vadd.f32 %v363, %v364
    %v366 = vmul.f32 %v362, %v362
    %v367 = vadd.f32 %v363, %v366
    %v368 = vrcp.pop %v365
    %v369 = vrcp.pop %v367
    %v370 = vmul.f32 %v365, %v368
    %v371 = vsub.f32 2.0, %v370
    %v372 = vmul.f32 %v368, %v371
    %v373 = vmul.f32 %v367, %v369
    %v374 = vsub.f32 2.0, %v373
    %v375 = vmul.f32 %v369, %v374
    %v376 = vmul.f32 %v356, %v372
    %v377 = vmul.f32 %v356, %v375
    %v378 = vmul.f32 %v361, %v372
    %v379 = vmul.f32 %v362, %v375
    %v380 = vadd.f32 %v376, %v377
    %v381 = vsub.f32 %v378, %v379
    %v382 = vsub.f32 %v376, %v377
    %v383 = vadd.f32 %v378, %v379
    %384 = vset.pattern.permute.xlu0 3
    %385 = vperm.xlu0 %384, %v71
    %v386 = vpop.permute.xlu0 %385
    %v388 = vmul.f32 %v386, %v380
    %389 = vset.pattern.permute.xlu0 3
    %390 = vperm.xlu0 %389, %v72
    %v391 = vpop.permute.xlu0 %390
    %v393 = vmul.f32 %v391, %v381
    %v394 = vadd.f32 %v388, %v393
    %v395 = vadd.f32 %v299, %v394
    %v396 = vmul.f32 %v391, %v382
    %v397 = vmul.f32 %v386, %v383
    %v398 = vsub.f32 %v396, %v397
    %v399 = vadd.f32 %v303, %v398
    %400 = vset.pattern.permute.xlu0 3
    %401 = vperm.xlu0 %400, %v93
    %v402 = vpop.permute.xlu0 %401
    %v404 = vmul.f32 %v402, %v380
    %405 = vset.pattern.permute.xlu0 3
    %406 = vperm.xlu0 %405, %v95
    %v407 = vpop.permute.xlu0 %406
    %v409 = vmul.f32 %v407, %v381
    %v410 = vadd.f32 %v404, %v409
    %v411 = vadd.f32 %v315, %v410
    %v412 = vmul.f32 %v407, %v382
    %v413 = vmul.f32 %v402, %v383
    %v414 = vsub.f32 %v412, %v413
    %v415 = vadd.f32 %v319, %v414
    %416 = vset.pattern.permute.xlu0 3
    %417 = vperm.xlu0 %416, %v116
    %v418 = vpop.permute.xlu0 %417
    %v420 = vmul.f32 %v418, %v380
    %421 = vset.pattern.permute.xlu0 3
    %422 = vperm.xlu0 %421, %v118
    %v423 = vpop.permute.xlu0 %422
    %v425 = vmul.f32 %v423, %v381
    %v426 = vadd.f32 %v420, %v425
    %v427 = vadd.f32 %v331, %v426
    %v428 = vmul.f32 %v423, %v382
    %v429 = vmul.f32 %v418, %v383
    %v430 = vsub.f32 %v428, %v429
    %v431 = vadd.f32 %v335, %v430
    %432 = vset.pattern.permute.xlu0 3
    %433 = vperm.xlu0 %432, %v139
    %v434 = vpop.permute.xlu0 %433
    %v436 = vmul.f32 %v434, %v380
    %437 = vset.pattern.permute.xlu0 3
    %438 = vperm.xlu0 %437, %v141
    %v439 = vpop.permute.xlu0 %438
    %v441 = vmul.f32 %v439, %v381
    %v442 = vadd.f32 %v436, %v441
    %v443 = vadd.f32 %v347, %v442
    %v444 = vmul.f32 %v439, %v382
    %v445 = vmul.f32 %v434, %v383
    %v446 = vsub.f32 %v444, %v445
    %v447 = vadd.f32 %v351, %v446
    %448 = vset.pattern.permute.xlu0 4
    %449 = vperm.xlu0 %448, %v29
    %v450 = vpop.permute.xlu0 %449
    %v452 = vsub.f32 %v32, %v450
    %453 = vset.pattern.permute.xlu0 4
    %454 = vperm.xlu0 %453, %v30
    %v455 = vpop.permute.xlu0 %454
    %v457 = vsub.f32 %v41, %v455
    %v458 = vadd.f32 %v41, %v455
    %v459 = vmul.f32 %v452, %v452
    %v460 = vmul.f32 %v457, %v457
    %v461 = vadd.f32 %v459, %v460
    %v462 = vmul.f32 %v458, %v458
    %v463 = vadd.f32 %v459, %v462
    %v464 = vrcp.pop %v461
    %v465 = vrcp.pop %v463
    %v466 = vmul.f32 %v461, %v464
    %v467 = vsub.f32 2.0, %v466
    %v468 = vmul.f32 %v464, %v467
    %v469 = vmul.f32 %v463, %v465
    %v470 = vsub.f32 2.0, %v469
    %v471 = vmul.f32 %v465, %v470
    %v472 = vmul.f32 %v452, %v468
    %v473 = vmul.f32 %v452, %v471
    %v474 = vmul.f32 %v457, %v468
    %v475 = vmul.f32 %v458, %v471
    %v476 = vadd.f32 %v472, %v473
    %v477 = vsub.f32 %v474, %v475
    %v478 = vsub.f32 %v472, %v473
    %v479 = vadd.f32 %v474, %v475
    %480 = vset.pattern.permute.xlu0 4
    %481 = vperm.xlu0 %480, %v71
    %v482 = vpop.permute.xlu0 %481
    %v484 = vmul.f32 %v482, %v476
    %485 = vset.pattern.permute.xlu0 4
    %486 = vperm.xlu0 %485, %v72
    %v487 = vpop.permute.xlu0 %486
    %v489 = vmul.f32 %v487, %v477
    %v490 = vadd.f32 %v484, %v489
    %v491 = vadd.f32 %v395, %v490
    %v492 = vmul.f32 %v487, %v478
    %v493 = vmul.f32 %v482, %v479
    %v494 = vsub.f32 %v492, %v493
    %v495 = vadd.f32 %v399, %v494
    %496 = vset.pattern.permute.xlu0 4
    %497 = vperm.xlu0 %496, %v93
    %v498 = vpop.permute.xlu0 %497
    %v500 = vmul.f32 %v498, %v476
    %501 = vset.pattern.permute.xlu0 4
    %502 = vperm.xlu0 %501, %v95
    %v503 = vpop.permute.xlu0 %502
    %v505 = vmul.f32 %v503, %v477
    %v506 = vadd.f32 %v500, %v505
    %v507 = vadd.f32 %v411, %v506
    %v508 = vmul.f32 %v503, %v478
    %v509 = vmul.f32 %v498, %v479
    %v510 = vsub.f32 %v508, %v509
    %v511 = vadd.f32 %v415, %v510
    %512 = vset.pattern.permute.xlu0 4
    %513 = vperm.xlu0 %512, %v116
    %v514 = vpop.permute.xlu0 %513
    %v516 = vmul.f32 %v514, %v476
    %517 = vset.pattern.permute.xlu0 4
    %518 = vperm.xlu0 %517, %v118
    %v519 = vpop.permute.xlu0 %518
    %v521 = vmul.f32 %v519, %v477
    %v522 = vadd.f32 %v516, %v521
    %v523 = vadd.f32 %v427, %v522
    %v524 = vmul.f32 %v519, %v478
    %v525 = vmul.f32 %v514, %v479
    %v526 = vsub.f32 %v524, %v525
    %v527 = vadd.f32 %v431, %v526
    %528 = vset.pattern.permute.xlu0 4
    %529 = vperm.xlu0 %528, %v139
    %v530 = vpop.permute.xlu0 %529
    %v532 = vmul.f32 %v530, %v476
    %533 = vset.pattern.permute.xlu0 4
    %534 = vperm.xlu0 %533, %v141
    %v535 = vpop.permute.xlu0 %534
    %v537 = vmul.f32 %v535, %v477
    %v538 = vadd.f32 %v532, %v537
    %v539 = vadd.f32 %v443, %v538
    %v540 = vmul.f32 %v535, %v478
    %v541 = vmul.f32 %v530, %v479
    %v542 = vsub.f32 %v540, %v541
    %v543 = vadd.f32 %v447, %v542
    %544 = vset.pattern.permute.xlu0 5
    %545 = vperm.xlu0 %544, %v29
    %v546 = vpop.permute.xlu0 %545
    %v548 = vsub.f32 %v32, %v546
    %549 = vset.pattern.permute.xlu0 5
    %550 = vperm.xlu0 %549, %v30
    %v551 = vpop.permute.xlu0 %550
    %v553 = vsub.f32 %v41, %v551
    %v554 = vadd.f32 %v41, %v551
    %v555 = vmul.f32 %v548, %v548
    %v556 = vmul.f32 %v553, %v553
    %v557 = vadd.f32 %v555, %v556
    %v558 = vmul.f32 %v554, %v554
    %v559 = vadd.f32 %v555, %v558
    %v560 = vrcp.pop %v557
    %v561 = vrcp.pop %v559
    %v562 = vmul.f32 %v557, %v560
    %v563 = vsub.f32 2.0, %v562
    %v564 = vmul.f32 %v560, %v563
    %v565 = vmul.f32 %v559, %v561
    %v566 = vsub.f32 2.0, %v565
    %v567 = vmul.f32 %v561, %v566
    %v568 = vmul.f32 %v548, %v564
    %v569 = vmul.f32 %v548, %v567
    %v570 = vmul.f32 %v553, %v564
    %v571 = vmul.f32 %v554, %v567
    %v572 = vadd.f32 %v568, %v569
    %v573 = vsub.f32 %v570, %v571
    %v574 = vsub.f32 %v568, %v569
    %v575 = vadd.f32 %v570, %v571
    %576 = vset.pattern.permute.xlu0 5
    %577 = vperm.xlu0 %576, %v71
    %v578 = vpop.permute.xlu0 %577
    %v580 = vmul.f32 %v578, %v572
    %581 = vset.pattern.permute.xlu0 5
    %582 = vperm.xlu0 %581, %v72
    %v583 = vpop.permute.xlu0 %582
    %v585 = vmul.f32 %v583, %v573
    %v586 = vadd.f32 %v580, %v585
    %v587 = vadd.f32 %v491, %v586
    %v588 = vmul.f32 %v583, %v574
    %v589 = vmul.f32 %v578, %v575
    %v590 = vsub.f32 %v588, %v589
    %v591 = vadd.f32 %v495, %v590
    %592 = vset.pattern.permute.xlu0 5
    %593 = vperm.xlu0 %592, %v93
    %v594 = vpop.permute.xlu0 %593
    %v596 = vmul.f32 %v594, %v572
    %597 = vset.pattern.permute.xlu0 5
    %598 = vperm.xlu0 %597, %v95
    %v599 = vpop.permute.xlu0 %598
    %v601 = vmul.f32 %v599, %v573
    %v602 = vadd.f32 %v596, %v601
    %v603 = vadd.f32 %v507, %v602
    %v604 = vmul.f32 %v599, %v574
    %v605 = vmul.f32 %v594, %v575
    %v606 = vsub.f32 %v604, %v605
    %v607 = vadd.f32 %v511, %v606
    %608 = vset.pattern.permute.xlu0 5
    %609 = vperm.xlu0 %608, %v116
    %v610 = vpop.permute.xlu0 %609
    %v612 = vmul.f32 %v610, %v572
    %613 = vset.pattern.permute.xlu0 5
    %614 = vperm.xlu0 %613, %v118
    %v615 = vpop.permute.xlu0 %614
    %v617 = vmul.f32 %v615, %v573
    %v618 = vadd.f32 %v612, %v617
    %v619 = vadd.f32 %v523, %v618
    %v620 = vmul.f32 %v615, %v574
    %v621 = vmul.f32 %v610, %v575
    %v622 = vsub.f32 %v620, %v621
    %v623 = vadd.f32 %v527, %v622
    %624 = vset.pattern.permute.xlu0 5
    %625 = vperm.xlu0 %624, %v139
    %v626 = vpop.permute.xlu0 %625
    %v628 = vmul.f32 %v626, %v572
    %629 = vset.pattern.permute.xlu0 5
    %630 = vperm.xlu0 %629, %v141
    %v631 = vpop.permute.xlu0 %630
    %v633 = vmul.f32 %v631, %v573
    %v634 = vadd.f32 %v628, %v633
    %v635 = vadd.f32 %v539, %v634
    %v636 = vmul.f32 %v631, %v574
    %v637 = vmul.f32 %v626, %v575
    %v638 = vsub.f32 %v636, %v637
    %v639 = vadd.f32 %v543, %v638
    %640 = vst [vmem:[#allocation2] sm:$0xff] %v587
    %641 = vst [vmem:[#allocation4] sm:$0xff] %v591
    %s642 = scalar_lea.vmem [#allocation2], %s91
    %643 = vst [vmem:[%s642] sm:$0xff] %v603
    %s644 = scalar_lea.vmem [#allocation4], %s91
    %645 = vst [vmem:[%s644] sm:$0xff] %v607
    %s646 = scalar_lea.vmem [#allocation2], %s114
    %647 = vst [vmem:[%s646] sm:$0xff] %v619
    %s648 = scalar_lea.vmem [#allocation4], %s114
    %649 = vst [vmem:[%s648] sm:$0xff] %v623
    %s650 = scalar_lea.vmem [#allocation2], %s137
    %651 = vst [vmem:[%s650] sm:$0xff] %v635
    %s652 = scalar_lea.vmem [#allocation4], %s137
    %653 = vst [vmem:[%s652] sm:$0xff] %v639
    // Predicated region
    $region26: #{tpu_custom_call.1} parent=1 // pred_check
      _
    $region27: #{tpu_custom_call.1} parent=1 // pred_check_branch
      %655 = sbr.rel (0) target = $region29
    $region28: #{tpu_custom_call.1} parent=1 // pred_region
      %657 = vsyncadd [#allocation3], 0
      %s658 = sshll.u32 [#allocation2], 4
      %s659 = int_to_ptr.vmem [resolvable:$true] %s658
      %s660 = sshll.u32 %s6, 4
      %s661 = int_to_ptr.hbm [resolvable:$true] %s660
      %666 = dma.vmem_to_hbm [thread:$0]  %s659, 512, %s661, [#allocation3], 128, 128, 8
    $region29: #{tpu_custom_call.1} parent=1 // pred_fallthru
      _
    // Predicated region
    $region30: #{tpu_custom_call.1} parent=1 // pred_check
      _
    $region31: #{tpu_custom_call.1} parent=1 // pred_check_branch
      %668 = sbr.rel (0) target = $region33
    $region32: #{tpu_custom_call.1} parent=1 // pred_region
      %670 = vsyncadd [#allocation5], 0
      %s671 = sshll.u32 [#allocation4], 4
      %s672 = int_to_ptr.vmem [resolvable:$true] %s671
      %s673 = sshll.u32 %s7, 4
      %s674 = int_to_ptr.hbm [resolvable:$true] %s673
      %679 = dma.vmem_to_hbm [thread:$0]  %s672, 512, %s674, [#allocation5], 128, 128, 8
    $region33: #{tpu_custom_call.1} parent=1 // pred_fallthru
      _
    // Predicated region
    $region34: #{tpu_custom_call.1} parent=1 // pred_check
      _
    $region35: #{tpu_custom_call.1} parent=1 // pred_check_branch
      %681 = sbr.rel (0) target = $region37
    $region36: #{tpu_custom_call.1} parent=1 // pred_region
      %683 = dma.done [#allocation3], 512
    $region37: #{tpu_custom_call.1} parent=1 // pred_fallthru
      _
    // Predicated region
    $region38: #{tpu_custom_call.1} parent=1 // pred_check
      _
    $region39: #{tpu_custom_call.1} parent=1 // pred_check_branch
      %685 = sbr.rel (0) target = $region41
    $region40: #{tpu_custom_call.1} parent=1 // pred_region
      %687 = dma.done [#allocation5], 512
    $region41: #{tpu_custom_call.1} parent=1 // pred_fallthru
      _
    %688 = vsyncpa [#allocation3], 1
    %689 = vsyncpa [#allocation5], 1

</llo_original>
